<compile_context>
chip_gen: v6e
topology: v6e:2x2x1
jax: 0.10.0
libtpu: 0.0.40
codegen_flags: <defaults>
</compile_context>

<pallas_src>
import functools
import math

import jax
import jax.numpy as jnp
from jax.experimental import pallas as pl
from jax.experimental.pallas import tpu as pltpu


# ----------------------------------------------------------------------------
# Fused Pallas kernel: patch embedding + positional encoding + all encoder blocks
# ----------------------------------------------------------------------------
def fused_vit_kernel(patches_ref, pw_ref, pe_ref,
                     wqkv_ref, bqkv_ref, wo_ref,
                     w1_ref, b1_ref, w2_ref, small_ref,
                     out_ref, *, n_heads, n_layers, batch_tile, seq_len):
    F = pe_ref.shape[1]
    hd = F // n_heads
    L = seq_len
    Bt = batch_tile
    M = Bt * L                                                        # matmul row count

    # ---- patch embedding + positional encoding (batch folded into the M rows) ----
    p = patches_ref[...].astype(jnp.bfloat16)                         # (M, C*P*P)
    x = jnp.dot(p, pw_ref[...], preferred_element_type=jnp.float32) + pe_ref[...]   # (M, F) f32

    def split_heads(t):
        # (M, F) -> (Bt*H, L, hd): per-head lane slices + leading-dim relabels only.
        parts = [t[:, h * hd:(h + 1) * hd] for h in range(n_heads)]   # H x (M, hd)
        th = jnp.stack(parts, axis=0)                                 # (H, M, hd)
        return th.reshape(n_heads * Bt, L, hd)                        # row-major relabel (free)

    def layer_body(l, x):
        xb = x.astype(jnp.bfloat16)

        # ---- fused QKV: one 2-D matmul, N = 3F (1/sqrt(hd) pre-folded into the Q columns) ----
        qkv = jnp.dot(xb, wqkv_ref[l], preferred_element_type=jnp.float32) + bqkv_ref[l]  # (M, 3F)
        q, k, v = qkv[:, :F], qkv[:, F:2 * F], qkv[:, 2 * F:]

        qh = split_heads(q).astype(jnp.bfloat16)                      # (Bt*H, L, hd)
        kh = split_heads(k).astype(jnp.bfloat16)
        vh = split_heads(v).astype(jnp.bfloat16)

        # ---- attention, batched over the (batch*head) group axis ----
        s = jnp.einsum('gqd,gkd->gqk', qh, kh,
                       preferred_element_type=jnp.float32)            # (Bt*H, L, L)
        s = s - jnp.max(s, axis=-1, keepdims=True)
        e = jnp.exp(s)
        # Exact division (approx reciprocal was flagged as a parity risk by review).
        pa = (e / jnp.sum(e, axis=-1, keepdims=True)).astype(jnp.bfloat16)
        o = jnp.einsum('gqk,gkd->gqd', pa, vh,
                       preferred_element_type=jnp.float32)            # (Bt*H, L, hd)

        # concat heads back along features (head-major columns): (Bt*H, L, hd) -> (M, F)
        o = o.reshape(n_heads, M, hd)                                 # leading-dim relabel (free)
        o2 = jnp.concatenate([o[h] for h in range(n_heads)], axis=-1).astype(jnp.bfloat16)

        smalls = small_ref[l]                                         # (6, F) packed per-layer vecs
        bo, ln1_g, ln1_b = smalls[0:1], smalls[1:2], smalls[2:3]
        ln2_g, ln2_b, b2 = smalls[3:4], smalls[4:5], smalls[5:6]

        # ---- output projection: head axis collapsed into K -> single (M,F)@(F,F) matmul ----
        attn = jnp.dot(o2, wo_ref[l], preferred_element_type=jnp.float32) + bo

        # ---- residual + LayerNorm 1 (dropout = identity in eval mode) ----
        y = x + attn
        mu = jnp.mean(y, axis=-1, keepdims=True)
        var = jnp.mean((y - mu) ** 2, axis=-1, keepdims=True)
        y = (y - mu) * jax.lax.rsqrt(var + 1e-5) * ln1_g + ln1_b

        # ---- feedforward (ReLU) ----
        h1 = jnp.dot(y.astype(jnp.bfloat16), w1_ref[l],
                     preferred_element_type=jnp.float32) + b1_ref[l]
        h1 = jnp.maximum(h1, 0.0)
        h2 = jnp.dot(h1.astype(jnp.bfloat16), w2_ref[l],
                     preferred_element_type=jnp.float32) + b2

        # ---- residual + LayerNorm 2 ----
        z = y + h2
        mu2 = jnp.mean(z, axis=-1, keepdims=True)
        var2 = jnp.mean((z - mu2) ** 2, axis=-1, keepdims=True)
        return (z - mu2) * jax.lax.rsqrt(var2 + 1e-5) * ln2_g + ln2_b

    x = jax.lax.fori_loop(0, n_layers, layer_body, x)
    out_ref[...] = x.astype(out_ref.dtype)                            # one (M, F) store per tile


# ----------------------------------------------------------------------------
# Wrapper: one pallas_call for the whole network
# ----------------------------------------------------------------------------
def _pick_batch_tile(batch, seq_len, target_rows=256):
    # Largest divisor of `batch` with Bt*L <= target_rows (128-row MXU fill on v5e,
    # 256 on v6e/v7x). At the toy config this yields Bt = batch.
    bt = 1
    for d in range(1, batch + 1):
        if batch % d == 0 and d * seq_len <= target_rows:
            bt = d
    return bt


def fused_vit(patches, pw_bf16, pe, params, n_heads, batch_tile=None):
    B, L, CPP = patches.shape
    F = pe.shape[1]
    assert F % n_heads == 0
    n_layers = params["wqkv"].shape[0]
    HID = params["w1"].shape[2]

    Bt = batch_tile if batch_tile is not None else _pick_batch_tile(B, L)
    assert B % Bt == 0
    M = Bt * L

    patches_flat = patches.reshape(B * L, CPP)        # fold batch into matmul M rows (XLA-side)
    pe_m = jnp.tile(pe, (Bt, 1))                      # (M, F): PE replicated per batch row block

    def inv(shape):
        return pl.BlockSpec(shape, lambda b: (0,) * len(shape))

    in_specs = [
        pl.BlockSpec((M, CPP), lambda b: (b, 0)),     # per-batch-tile patches
        inv((CPP, F)),                                # patch-embedding weight (bf16)
        inv((M, F)),                                  # positional encoding, pre-tiled (f32)
        inv((n_layers, F, 3 * F)),                    # fused Wqkv (bf16), scale folded into Q cols
        inv((n_layers, 1, 3 * F)),                    # fused bqkv (f32)
        inv((n_layers, F, F)),                        # Wo (bf16)
        inv((n_layers, F, HID)),                      # W1 (bf16)
        inv((n_layers, 1, HID)),                      # b1 (f32)
        inv((n_layers, HID, F)),                      # W2 (bf16)
        inv((n_layers, 6, F)),                        # packed [bo, ln1_g, ln1_b, ln2_g, ln2_b, b2]
    ]

    out = pl.pallas_call(
        functools.partial(fused_vit_kernel, n_heads=n_heads, n_layers=n_layers,
                          batch_tile=Bt, seq_len=L),
        out_shape=jax.ShapeDtypeStruct((B * L, F), jnp.float32),
        grid=(B // Bt,),
        in_specs=in_specs,
        out_specs=pl.BlockSpec((M, F), lambda b: (b, 0)),
        compiler_params=pltpu.CompilerParams(
            dimension_semantics=("parallel",)),       # batch-tile axis can shard across TCs (v7x)
    )(patches_flat, pw_bf16, pe_m,
      params["wqkv"], params["bqkv"], params["wo"],
      params["w1"], params["b1"], params["w2"], params["small"])
    return out.reshape(B, L, F)


# ----------------------------------------------------------------------------
# Glue: unfold, positional encoding, parameter init, full forward
# ----------------------------------------------------------------------------
def unfold_patches(x, patch_dim):
    # x: (B, C, H, W) -> (B, L, C*P*P), matching F.unfold(...).permute(0, 2, 1)
    B, C, H, W = x.shape
    P = patch_dim
    Hp, Wp = H // P, W // P
    x = x.reshape(B, C, Hp, P, Wp, P)
    x = jnp.transpose(x, (0, 2, 4, 1, 3, 5))          # (B, Hp, Wp, C, P, P)
    return x.reshape(B, Hp * Wp, C * P * P)


def sinusoidal_pe(n_pos, n_feat):
    pos = jnp.arange(n_pos, dtype=jnp.float32)[:, None]
    i = jnp.arange(n_feat // 2, dtype=jnp.float32)[None, :]
    angle = pos / jnp.power(10000.0, 2.0 * i / n_feat)
    pe = jnp.zeros((n_pos, n_feat), dtype=jnp.float32)
    pe = pe.at[:, 0::2].set(jnp.sin(angle))
    pe = pe.at[:, 1::2].set(jnp.cos(angle))
    return pe


def init_params(key, img_depth, patch_dim, mlp_feature, mlp_heads, mlp_hidden, mlp_blocks):
    cpp = img_depth * patch_dim * patch_dim
    hd = mlp_feature // mlp_heads
    scale = 1.0 / math.sqrt(hd)
    keys = jax.random.split(key, 1 + mlp_blocks)
    # weightmatrix ~ randn, like the PyTorch module parameter
    weightmatrix = jax.random.normal(keys[0], (cpp, mlp_feature), dtype=jnp.float32)

    wqkv, bqkv, wo, w1, b1, w2, small = [], [], [], [], [], [], []
    s = 0.05
    for blk in range(mlp_blocks):
        bk = jax.random.split(keys[1 + blk], 6)
        wq = s * jax.random.normal(bk[0], (mlp_feature, mlp_feature), jnp.float32)
        wk = s * jax.random.normal(bk[1], (mlp_feature, mlp_feature), jnp.float32)
        wv = s * jax.random.normal(bk[2], (mlp_feature, mlp_feature), jnp.float32)
        wob = s * jax.random.normal(bk[3], (mlp_feature, mlp_feature), jnp.float32)
        # Fused QKV weight (F, 3F); 1/sqrt(hd) attention scale folded into the Q columns.
        wqkv.append(jnp.concatenate([wq * scale, wk, wv], axis=1))
        bqkv.append(jnp.zeros((1, 3 * mlp_feature), jnp.float32))     # q-part pre-scaled (zeros)
        wo.append(wob)                                                # concat(heads) @ Wo layout
        w1.append(s * jax.random.normal(bk[4], (mlp_feature, mlp_hidden), jnp.float32))
        b1.append(jnp.zeros((1, mlp_hidden), jnp.float32))
        w2.append(s * jax.random.normal(bk[5], (mlp_hidden, mlp_feature), jnp.float32))
        # Packed tiny per-layer vectors: rows = [bo, ln1_g, ln1_b, ln2_g, ln2_b, b2]
        small.append(jnp.stack([
            jnp.zeros((mlp_feature,), jnp.float32),   # bo
            jnp.ones((mlp_feature,), jnp.float32),    # ln1 gamma
            jnp.zeros((mlp_feature,), jnp.float32),   # ln1 beta
            jnp.ones((mlp_feature,), jnp.float32),    # ln2 gamma
            jnp.zeros((mlp_feature,), jnp.float32),   # ln2 beta
            jnp.zeros((mlp_feature,), jnp.float32),   # b2
        ], axis=0))                                   # (6, F)

    params = {
        "wqkv": jnp.stack(wqkv).astype(jnp.bfloat16),  # MXU-side weights in bf16 (f32 accum)
        "bqkv": jnp.stack(bqkv),
        "wo": jnp.stack(wo).astype(jnp.bfloat16),
        "w1": jnp.stack(w1).astype(jnp.bfloat16),
        "b1": jnp.stack(b1),
        "w2": jnp.stack(w2).astype(jnp.bfloat16),
        "small": jnp.stack(small),
    }
    return weightmatrix, params


def cam_vit_forward(x, weightmatrix, params, patch_dim, mlp_heads):
    patches = unfold_patches(x, patch_dim)             # (B, L, C*P*P)
    L = patches.shape[1]
    F = weightmatrix.shape[1]
    pe = sinusoidal_pe(L, F)
    return fused_vit(patches, weightmatrix.astype(jnp.bfloat16), pe, params, mlp_heads)


# ----------------------------------------------------------------------------
if __name__ == "__main__":
    # Small, module-consistent config
    B, C, Himg, Wimg = 2, 4, 16, 16
    patch_dim = 4
    mlp_feature, mlp_heads, mlp_hidden, mlp_blocks = 32, 4, 64, 2

    key = jax.random.PRNGKey(0)
    kx, kp = jax.random.split(key)
    x = jax.random.normal(kx, (B, C, Himg, Wimg), dtype=jnp.float32)

    weightmatrix, params = init_params(kp, C, patch_dim, mlp_feature, mlp_heads,
                                       mlp_hidden, mlp_blocks)

    out = cam_vit_forward(x, weightmatrix, params, patch_dim, mlp_heads)
    out = jax.block_until_ready(out)
    assert out.shape == (B, (Himg // patch_dim) * (Wimg // patch_dim), mlp_feature)
    print("KERNEL_OK")
</pallas_src>

<mosaic_0001>
module attributes {stable_mosaic.version = 11 : i64} {
  func.func @fused_vit_kernel(%arg0: i32, %arg1: memref<32x64xf32, #tpu.memory_space<vmem>>, %arg2: memref<64x32xbf16, #tpu.memory_space<vmem>>, %arg3: memref<32x32xf32, #tpu.memory_space<vmem>>, %arg4: memref<2x32x96xbf16, #tpu.memory_space<vmem>>, %arg5: memref<2x1x96xf32, #tpu.memory_space<vmem>>, %arg6: memref<2x32x32xbf16, #tpu.memory_space<vmem>>, %arg7: memref<2x32x64xbf16, #tpu.memory_space<vmem>>, %arg8: memref<2x1x64xf32, #tpu.memory_space<vmem>>, %arg9: memref<2x64x32xbf16, #tpu.memory_space<vmem>>, %arg10: memref<2x6x32xf32, #tpu.memory_space<vmem>>, %arg11: memref<32x32xf32, #tpu.memory_space<vmem>>) attributes {dimension_semantics = [#tpu.dimension_semantics<parallel>], iteration_bounds = array<i64: 1>, scalar_prefetch = 0 : i64, scratch_operands = 0 : i64, tpu.core_type = #tpu.core_type<tc>, window_params = [{transform_indices = @transform_0, window_bounds = array<i64: 32, 64>}, {pipeline_mode = #tpu.pipeline_mode<synchronous>, transform_indices = @transform_1, window_bounds = array<i64: 64, 32>}, {pipeline_mode = #tpu.pipeline_mode<synchronous>, transform_indices = @transform_2, window_bounds = array<i64: 32, 32>}, {pipeline_mode = #tpu.pipeline_mode<synchronous>, transform_indices = @transform_3, window_bounds = array<i64: 2, 32, 96>}, {pipeline_mode = #tpu.pipeline_mode<synchronous>, transform_indices = @transform_4, window_bounds = array<i64: 2, 1, 96>}, {pipeline_mode = #tpu.pipeline_mode<synchronous>, transform_indices = @transform_5, window_bounds = array<i64: 2, 32, 32>}, {pipeline_mode = #tpu.pipeline_mode<synchronous>, transform_indices = @transform_6, window_bounds = array<i64: 2, 32, 64>}, {pipeline_mode = #tpu.pipeline_mode<synchronous>, transform_indices = @transform_7, window_bounds = array<i64: 2, 1, 64>}, {pipeline_mode = #tpu.pipeline_mode<synchronous>, transform_indices = @transform_8, window_bounds = array<i64: 2, 64, 32>}, {pipeline_mode = #tpu.pipeline_mode<synchronous>, transform_indices = @transform_9, window_bounds = array<i64: 2, 6, 32>}, {transform_indices = @transform_10, window_bounds = array<i64: 32, 32>}]} {
    %c0 = arith.constant 0 : index
    %c0_0 = arith.constant 0 : index
    %0 = vector.load %arg1[%c0, %c0_0] : memref<32x64xf32, #tpu.memory_space<vmem>>, vector<32x64xf32>
    %1 = arith.truncf %0 : vector<32x64xf32> to vector<32x64xbf16>
    %c0_1 = arith.constant 0 : index
    %c0_2 = arith.constant 0 : index
    %2 = vector.load %arg2[%c0_1, %c0_2] : memref<64x32xbf16, #tpu.memory_space<vmem>>, vector<64x32xbf16>
    %cst = arith.constant dense<0.000000e+00> : vector<32x32xf32>
    %3 = tpu.matmul %1, %2, %cst {dimension_numbers = #tpu.dot_dimension_numbers<[1], [0], [0], [1], [0, 0, 1, 1], [], []>} : vector<32x64xbf16>, vector<64x32xbf16>, vector<32x32xf32> -> vector<32x32xf32>
    %c0_3 = arith.constant 0 : index
    %c0_4 = arith.constant 0 : index
    %4 = vector.load %arg3[%c0_3, %c0_4] : memref<32x32xf32, #tpu.memory_space<vmem>>, vector<32x32xf32>
    %5 = arith.addf %3, %4 : vector<32x32xf32>
    %c0_i32 = arith.constant 0 : i32
    %c2_i32 = arith.constant 2 : i32
    %6 = arith.addi %c0_i32, %c2_i32 : i32
    %c1_i32 = arith.constant 1 : i32
    %7 = scf.for %arg12 = %c0_i32 to %6 step %c1_i32 iter_args(%arg13 = %5) -> (vector<32x32xf32>)  : i32 {
      %9 = arith.truncf %arg13 : vector<32x32xf32> to vector<32x32xbf16>
      %10 = arith.index_cast %arg12 : i32 to index
      %c0_8 = arith.constant 0 : index
      %c0_9 = arith.constant 0 : index
      %11 = vector.load %arg4[%10, %c0_8, %c0_9] : memref<2x32x96xbf16, #tpu.memory_space<vmem>>, vector<1x32x96xbf16>
      %12 = vector.shape_cast %11 : vector<1x32x96xbf16> to vector<32x96xbf16>
      %cst_10 = arith.constant dense<0.000000e+00> : vector<32x96xf32>
      %13 = tpu.matmul %9, %12, %cst_10 {dimension_numbers = #tpu.dot_dimension_numbers<[1], [0], [0], [1], [0, 0, 1, 1], [], []>} : vector<32x32xbf16>, vector<32x96xbf16>, vector<32x96xf32> -> vector<32x96xf32>
      %14 = arith.index_cast %arg12 : i32 to index
      %c0_11 = arith.constant 0 : index
      %c0_12 = arith.constant 0 : index
      %15 = vector.load %arg5[%14, %c0_11, %c0_12] : memref<2x1x96xf32, #tpu.memory_space<vmem>>, vector<1x1x96xf32>
      %16 = vector.shape_cast %15 : vector<1x1x96xf32> to vector<1x96xf32>
      %17 = vector.broadcast %16 : vector<1x96xf32> to vector<32x96xf32>
      %18 = arith.addf %13, %17 : vector<32x96xf32>
      %19 = vector.extract_strided_slice %18 {offsets = [0, 0], sizes = [32, 32], strides = [1, 1]} : vector<32x96xf32> to vector<32x32xf32>
      %20 = vector.extract_strided_slice %18 {offsets = [0, 32], sizes = [32, 32], strides = [1, 1]} : vector<32x96xf32> to vector<32x32xf32>
      %21 = vector.extract_strided_slice %18 {offsets = [0, 64], sizes = [32, 32], strides = [1, 1]} : vector<32x96xf32> to vector<32x32xf32>
      %22 = vector.extract_strided_slice %19 {offsets = [0, 0], sizes = [32, 8], strides = [1, 1]} : vector<32x32xf32> to vector<32x8xf32>
      %23 = vector.extract_strided_slice %19 {offsets = [0, 8], sizes = [32, 8], strides = [1, 1]} : vector<32x32xf32> to vector<32x8xf32>
      %24 = vector.extract_strided_slice %19 {offsets = [0, 16], sizes = [32, 8], strides = [1, 1]} : vector<32x32xf32> to vector<32x8xf32>
      %25 = vector.extract_strided_slice %19 {offsets = [0, 24], sizes = [32, 8], strides = [1, 1]} : vector<32x32xf32> to vector<32x8xf32>
      %26 = vector.shape_cast %22 : vector<32x8xf32> to vector<1x32x8xf32>
      %27 = vector.shape_cast %23 : vector<32x8xf32> to vector<1x32x8xf32>
      %28 = vector.shape_cast %24 : vector<32x8xf32> to vector<1x32x8xf32>
      %29 = vector.shape_cast %25 : vector<32x8xf32> to vector<1x32x8xf32>
      %30 = tpu.concatenate %26, %27, %28, %29 in 0 : vector<1x32x8xf32>, vector<1x32x8xf32>, vector<1x32x8xf32>, vector<1x32x8xf32> -> vector<4x32x8xf32>
      %31 = vector.shape_cast %30 : vector<4x32x8xf32> to vector<8x16x8xf32>
      %32 = arith.truncf %31 : vector<8x16x8xf32> to vector<8x16x8xbf16>
      %33 = vector.extract_strided_slice %20 {offsets = [0, 0], sizes = [32, 8], strides = [1, 1]} : vector<32x32xf32> to vector<32x8xf32>
      %34 = vector.extract_strided_slice %20 {offsets = [0, 8], sizes = [32, 8], strides = [1, 1]} : vector<32x32xf32> to vector<32x8xf32>
      %35 = vector.extract_strided_slice %20 {offsets = [0, 16], sizes = [32, 8], strides = [1, 1]} : vector<32x32xf32> to vector<32x8xf32>
      %36 = vector.extract_strided_slice %20 {offsets = [0, 24], sizes = [32, 8], strides = [1, 1]} : vector<32x32xf32> to vector<32x8xf32>
      %37 = vector.shape_cast %33 : vector<32x8xf32> to vector<1x32x8xf32>
      %38 = vector.shape_cast %34 : vector<32x8xf32> to vector<1x32x8xf32>
      %39 = vector.shape_cast %35 : vector<32x8xf32> to vector<1x32x8xf32>
      %40 = vector.shape_cast %36 : vector<32x8xf32> to vector<1x32x8xf32>
      %41 = tpu.concatenate %37, %38, %39, %40 in 0 : vector<1x32x8xf32>, vector<1x32x8xf32>, vector<1x32x8xf32>, vector<1x32x8xf32> -> vector<4x32x8xf32>
      %42 = vector.shape_cast %41 : vector<4x32x8xf32> to vector<8x16x8xf32>
      %43 = arith.truncf %42 : vector<8x16x8xf32> to vector<8x16x8xbf16>
      %44 = vector.extract_strided_slice %21 {offsets = [0, 0], sizes = [32, 8], strides = [1, 1]} : vector<32x32xf32> to vector<32x8xf32>
      %45 = vector.extract_strided_slice %21 {offsets = [0, 8], sizes = [32, 8], strides = [1, 1]} : vector<32x32xf32> to vector<32x8xf32>
      %46 = vector.extract_strided_slice %21 {offsets = [0, 16], sizes = [32, 8], strides = [1, 1]} : vector<32x32xf32> to vector<32x8xf32>
      %47 = vector.extract_strided_slice %21 {offsets = [0, 24], sizes = [32, 8], strides = [1, 1]} : vector<32x32xf32> to vector<32x8xf32>
      %48 = vector.shape_cast %44 : vector<32x8xf32> to vector<1x32x8xf32>
      %49 = vector.shape_cast %45 : vector<32x8xf32> to vector<1x32x8xf32>
      %50 = vector.shape_cast %46 : vector<32x8xf32> to vector<1x32x8xf32>
      %51 = vector.shape_cast %47 : vector<32x8xf32> to vector<1x32x8xf32>
      %52 = tpu.concatenate %48, %49, %50, %51 in 0 : vector<1x32x8xf32>, vector<1x32x8xf32>, vector<1x32x8xf32>, vector<1x32x8xf32> -> vector<4x32x8xf32>
      %53 = vector.shape_cast %52 : vector<4x32x8xf32> to vector<8x16x8xf32>
      %54 = arith.truncf %53 : vector<8x16x8xf32> to vector<8x16x8xbf16>
      "tpu.trace_start"() <{level = 10 : i32, message = "gqd,gkd->gqk"}> : () -> ()
      %cst_13 = arith.constant dense<0.000000e+00> : vector<8x16x16xf32>
      %55 = tpu.matmul %32, %43, %cst_13 {dimension_numbers = #tpu.dot_dimension_numbers<[2], [2], [1], [1], [0, 0, 0, 1, 1, 1], [0], [0]>} : vector<8x16x8xbf16>, vector<8x16x8xbf16>, vector<8x16x16xf32> -> vector<8x16x16xf32>
      "tpu.trace_stop"() : () -> ()
      %cst_14 = arith.constant dense<0xFF800000> : vector<8x16xf32>
      %56 = vector.multi_reduction <maximumf>, %55, %cst_14 [2] : vector<8x16x16xf32> to vector<8x16xf32>
      %57 = vector.shape_cast %56 : vector<8x16xf32> to vector<8x16x1xf32>
      %58 = vector.broadcast %57 : vector<8x16x1xf32> to vector<8x16x16xf32>
      %59 = arith.subf %55, %58 : vector<8x16x16xf32>
      %60 = math.exp %59 : vector<8x16x16xf32>
      %cst_15 = arith.constant dense<0.000000e+00> : vector<8x16xf32>
      %61 = vector.multi_reduction <add>, %60, %cst_15 [2] : vector<8x16x16xf32> to vector<8x16xf32>
      %62 = vector.shape_cast %61 : vector<8x16xf32> to vector<8x16x1xf32>
      %63 = vector.broadcast %62 : vector<8x16x1xf32> to vector<8x16x16xf32>
      %64 = arith.divf %60, %63 : vector<8x16x16xf32>
      %65 = arith.truncf %64 : vector<8x16x16xf32> to vector<8x16x16xbf16>
      "tpu.trace_start"() <{level = 10 : i32, message = "gqk,gkd->gqd"}> : () -> ()
      %cst_16 = arith.constant dense<0.000000e+00> : vector<8x16x8xf32>
      %66 = tpu.matmul %65, %54, %cst_16 {dimension_numbers = #tpu.dot_dimension_numbers<[2], [1], [1], [2], [0, 0, 0, 1, 1, 2], [0], [0]>} : vector<8x16x16xbf16>, vector<8x16x8xbf16>, vector<8x16x8xf32> -> vector<8x16x8xf32>
      "tpu.trace_stop"() : () -> ()
      %67 = vector.shape_cast %66 : vector<8x16x8xf32> to vector<4x32x8xf32>
      %68 = vector.extract_strided_slice %67 {offsets = [0, 0, 0], sizes = [1, 32, 8], strides = [1, 1, 1]} : vector<4x32x8xf32> to vector<1x32x8xf32>
      %69 = vector.shape_cast %68 : vector<1x32x8xf32> to vector<32x8xf32>
      %70 = vector.extract_strided_slice %67 {offsets = [1, 0, 0], sizes = [1, 32, 8], strides = [1, 1, 1]} : vector<4x32x8xf32> to vector<1x32x8xf32>
      %71 = vector.shape_cast %70 : vector<1x32x8xf32> to vector<32x8xf32>
      %72 = vector.extract_strided_slice %67 {offsets = [2, 0, 0], sizes = [1, 32, 8], strides = [1, 1, 1]} : vector<4x32x8xf32> to vector<1x32x8xf32>
      %73 = vector.shape_cast %72 : vector<1x32x8xf32> to vector<32x8xf32>
      %74 = vector.extract_strided_slice %67 {offsets = [3, 0, 0], sizes = [1, 32, 8], strides = [1, 1, 1]} : vector<4x32x8xf32> to vector<1x32x8xf32>
      %75 = vector.shape_cast %74 : vector<1x32x8xf32> to vector<32x8xf32>
      %76 = tpu.concatenate %69, %71, %73, %75 in 1 : vector<32x8xf32>, vector<32x8xf32>, vector<32x8xf32>, vector<32x8xf32> -> vector<32x32xf32>
      %77 = arith.truncf %76 : vector<32x32xf32> to vector<32x32xbf16>
      %78 = arith.index_cast %arg12 : i32 to index
      %c0_17 = arith.constant 0 : index
      %c0_18 = arith.constant 0 : index
      %79 = vector.load %arg10[%78, %c0_17, %c0_18] : memref<2x6x32xf32, #tpu.memory_space<vmem>>, vector<1x6x32xf32>
      %80 = vector.shape_cast %79 : vector<1x6x32xf32> to vector<6x32xf32>
      %81 = vector.extract_strided_slice %80 {offsets = [0, 0], sizes = [1, 32], strides = [1, 1]} : vector<6x32xf32> to vector<1x32xf32>
      %82 = vector.extract_strided_slice %80 {offsets = [1, 0], sizes = [1, 32], strides = [1, 1]} : vector<6x32xf32> to vector<1x32xf32>
      %83 = vector.extract_strided_slice %80 {offsets = [2, 0], sizes = [1, 32], strides = [1, 1]} : vector<6x32xf32> to vector<1x32xf32>
      %84 = vector.extract_strided_slice %80 {offsets = [3, 0], sizes = [1, 32], strides = [1, 1]} : vector<6x32xf32> to vector<1x32xf32>
      %85 = vector.extract_strided_slice %80 {offsets = [4, 0], sizes = [1, 32], strides = [1, 1]} : vector<6x32xf32> to vector<1x32xf32>
      %86 = vector.extract_strided_slice %80 {offsets = [5, 0], sizes = [1, 32], strides = [1, 1]} : vector<6x32xf32> to vector<1x32xf32>
      %87 = arith.index_cast %arg12 : i32 to index
      %c0_19 = arith.constant 0 : index
      %c0_20 = arith.constant 0 : index
      %88 = vector.load %arg6[%87, %c0_19, %c0_20] : memref<2x32x32xbf16, #tpu.memory_space<vmem>>, vector<1x32x32xbf16>
      %89 = vector.shape_cast %88 : vector<1x32x32xbf16> to vector<32x32xbf16>
      %cst_21 = arith.constant dense<0.000000e+00> : vector<32x32xf32>
      %90 = tpu.matmul %77, %89, %cst_21 {dimension_numbers = #tpu.dot_dimension_numbers<[1], [0], [0], [1], [0, 0, 1, 1], [], []>} : vector<32x32xbf16>, vector<32x32xbf16>, vector<32x32xf32> -> vector<32x32xf32>
      %91 = vector.broadcast %81 : vector<1x32xf32> to vector<32x32xf32>
      %92 = arith.addf %90, %91 : vector<32x32xf32>
      %93 = arith.addf %arg13, %92 : vector<32x32xf32>
      %cst_22 = arith.constant dense<0.000000e+00> : vector<32xf32>
      %94 = vector.multi_reduction <add>, %93, %cst_22 [1] : vector<32x32xf32> to vector<32xf32>
      %95 = vector.shape_cast %94 : vector<32xf32> to vector<32x1xf32>
      %cst_23 = arith.constant 3.200000e+01 : f32
      %96 = vector.broadcast %cst_23 : f32 to vector<32x1xf32>
      %97 = arith.divf %95, %96 : vector<32x1xf32>
      %98 = vector.broadcast %97 : vector<32x1xf32> to vector<32x32xf32>
      %99 = arith.subf %93, %98 : vector<32x32xf32>
      %100 = arith.mulf %99, %99 : vector<32x32xf32>
      %cst_24 = arith.constant dense<0.000000e+00> : vector<32xf32>
      %101 = vector.multi_reduction <add>, %100, %cst_24 [1] : vector<32x32xf32> to vector<32xf32>
      %102 = vector.shape_cast %101 : vector<32xf32> to vector<32x1xf32>
      %cst_25 = arith.constant 3.200000e+01 : f32
      %103 = vector.broadcast %cst_25 : f32 to vector<32x1xf32>
      %104 = arith.divf %102, %103 : vector<32x1xf32>
      %105 = vector.broadcast %97 : vector<32x1xf32> to vector<32x32xf32>
      %106 = arith.subf %93, %105 : vector<32x32xf32>
      %cst_26 = arith.constant 9.99999974E-6 : f32
      %107 = vector.broadcast %cst_26 : f32 to vector<32x1xf32>
      %108 = arith.addf %104, %107 : vector<32x1xf32>
      %109 = math.rsqrt %108 : vector<32x1xf32>
      %110 = vector.broadcast %109 : vector<32x1xf32> to vector<32x32xf32>
      %111 = arith.mulf %106, %110 : vector<32x32xf32>
      %112 = vector.broadcast %82 : vector<1x32xf32> to vector<32x32xf32>
      %113 = arith.mulf %111, %112 : vector<32x32xf32>
      %114 = vector.broadcast %83 : vector<1x32xf32> to vector<32x32xf32>
      %115 = arith.addf %113, %114 : vector<32x32xf32>
      %116 = arith.truncf %115 : vector<32x32xf32> to vector<32x32xbf16>
      %117 = arith.index_cast %arg12 : i32 to index
      %c0_27 = arith.constant 0 : index
      %c0_28 = arith.constant 0 : index
      %118 = vector.load %arg7[%117, %c0_27, %c0_28] : memref<2x32x64xbf16, #tpu.memory_space<vmem>>, vector<1x32x64xbf16>
      %119 = vector.shape_cast %118 : vector<1x32x64xbf16> to vector<32x64xbf16>
      %cst_29 = arith.constant dense<0.000000e+00> : vector<32x64xf32>
      %120 = tpu.matmul %116, %119, %cst_29 {dimension_numbers = #tpu.dot_dimension_numbers<[1], [0], [0], [1], [0, 0, 1, 1], [], []>} : vector<32x32xbf16>, vector<32x64xbf16>, vector<32x64xf32> -> vector<32x64xf32>
      %121 = arith.index_cast %arg12 : i32 to index
      %c0_30 = arith.constant 0 : index
      %c0_31 = arith.constant 0 : index
      %122 = vector.load %arg8[%121, %c0_30, %c0_31] : memref<2x1x64xf32, #tpu.memory_space<vmem>>, vector<1x1x64xf32>
      %123 = vector.shape_cast %122 : vector<1x1x64xf32> to vector<1x64xf32>
      %124 = vector.broadcast %123 : vector<1x64xf32> to vector<32x64xf32>
      %125 = arith.addf %120, %124 : vector<32x64xf32>
      %cst_32 = arith.constant 0.000000e+00 : f32
      %126 = vector.broadcast %cst_32 : f32 to vector<32x64xf32>
      %127 = arith.maximumf %125, %126 : vector<32x64xf32>
      %128 = arith.truncf %127 : vector<32x64xf32> to vector<32x64xbf16>
      %129 = arith.index_cast %arg12 : i32 to index
      %c0_33 = arith.constant 0 : index
      %c0_34 = arith.constant 0 : index
      %130 = vector.load %arg9[%129, %c0_33, %c0_34] : memref<2x64x32xbf16, #tpu.memory_space<vmem>>, vector<1x64x32xbf16>
      %131 = vector.shape_cast %130 : vector<1x64x32xbf16> to vector<64x32xbf16>
      %cst_35 = arith.constant dense<0.000000e+00> : vector<32x32xf32>
      %132 = tpu.matmul %128, %131, %cst_35 {dimension_numbers = #tpu.dot_dimension_numbers<[1], [0], [0], [1], [0, 0, 1, 1], [], []>} : vector<32x64xbf16>, vector<64x32xbf16>, vector<32x32xf32> -> vector<32x32xf32>
      %133 = vector.broadcast %86 : vector<1x32xf32> to vector<32x32xf32>
      %134 = arith.addf %132, %133 : vector<32x32xf32>
      %135 = arith.addf %115, %134 : vector<32x32xf32>
      %cst_36 = arith.constant dense<0.000000e+00> : vector<32xf32>
      %136 = vector.multi_reduction <add>, %135, %cst_36 [1] : vector<32x32xf32> to vector<32xf32>
      %137 = vector.shape_cast %136 : vector<32xf32> to vector<32x1xf32>
      %cst_37 = arith.constant 3.200000e+01 : f32
      %138 = vector.broadcast %cst_37 : f32 to vector<32x1xf32>
      %139 = arith.divf %137, %138 : vector<32x1xf32>
      %140 = vector.broadcast %139 : vector<32x1xf32> to vector<32x32xf32>
      %141 = arith.subf %135, %140 : vector<32x32xf32>
      %142 = arith.mulf %141, %141 : vector<32x32xf32>
      %cst_38 = arith.constant dense<0.000000e+00> : vector<32xf32>
      %143 = vector.multi_reduction <add>, %142, %cst_38 [1] : vector<32x32xf32> to vector<32xf32>
      %144 = vector.shape_cast %143 : vector<32xf32> to vector<32x1xf32>
      %cst_39 = arith.constant 3.200000e+01 : f32
      %145 = vector.broadcast %cst_39 : f32 to vector<32x1xf32>
      %146 = arith.divf %144, %145 : vector<32x1xf32>
      %147 = vector.broadcast %139 : vector<32x1xf32> to vector<32x32xf32>
      %148 = arith.subf %135, %147 : vector<32x32xf32>
      %cst_40 = arith.constant 9.99999974E-6 : f32
      %149 = vector.broadcast %cst_40 : f32 to vector<32x1xf32>
      %150 = arith.addf %146, %149 : vector<32x1xf32>
      %151 = math.rsqrt %150 : vector<32x1xf32>
      %152 = vector.broadcast %151 : vector<32x1xf32> to vector<32x32xf32>
      %153 = arith.mulf %148, %152 : vector<32x32xf32>
      %154 = vector.broadcast %84 : vector<1x32xf32> to vector<32x32xf32>
      %155 = arith.mulf %153, %154 : vector<32x32xf32>
      %156 = vector.broadcast %85 : vector<1x32xf32> to vector<32x32xf32>
      %157 = arith.addf %155, %156 : vector<32x32xf32>
      scf.yield %157 : vector<32x32xf32>
    }
    %c2_i32_5 = arith.constant 2 : i32
    %c0_6 = arith.constant 0 : index
    %c0_7 = arith.constant 0 : index
    %8 = vector.load %arg11[%c0_6, %c0_7] : memref<32x32xf32, #tpu.memory_space<vmem>>, vector<32x32xf32>
    tpu.vector_store %arg11[%c0_6, %c0_7], %7 {strides = array<i32>} : memref<32x32xf32, #tpu.memory_space<vmem>>, vector<32x32xf32>,
    return
  }
  func.func @transform_0(%arg0: i32) -> (i32, i32) {
    %c0_i32 = arith.constant 0 : i32
    %c0_i32_0 = arith.constant 0 : i32
    return %arg0, %c0_i32 : i32, i32
  }
  func.func @transform_1(%arg0: i32) -> (i32, i32) {
    %c0_i32 = arith.constant 0 : i32
    %c0_i32_0 = arith.constant 0 : i32
    %c0_i32_1 = arith.constant 0 : i32
    return %c0_i32, %c0_i32_0 : i32, i32
  }
  func.func @transform_2(%arg0: i32) -> (i32, i32) {
    %c0_i32 = arith.constant 0 : i32
    %c0_i32_0 = arith.constant 0 : i32
    %c0_i32_1 = arith.constant 0 : i32
    return %c0_i32, %c0_i32_0 : i32, i32
  }
  func.func @transform_3(%arg0: i32) -> (i32, i32, i32) {
    %c0_i32 = arith.constant 0 : i32
    %c0_i32_0 = arith.constant 0 : i32
    %c0_i32_1 = arith.constant 0 : i32
    %c0_i32_2 = arith.constant 0 : i32
    return %c0_i32, %c0_i32_0, %c0_i32_1 : i32, i32, i32
  }
  func.func @transform_4(%arg0: i32) -> (i32, i32, i32) {
    %c0_i32 = arith.constant 0 : i32
    %c0_i32_0 = arith.constant 0 : i32
    %c0_i32_1 = arith.constant 0 : i32
    %c0_i32_2 = arith.constant 0 : i32
    return %c0_i32, %c0_i32_0, %c0_i32_1 : i32, i32, i32
  }
  func.func @transform_5(%arg0: i32) -> (i32, i32, i32) {
    %c0_i32 = arith.constant 0 : i32
    %c0_i32_0 = arith.constant 0 : i32
    %c0_i32_1 = arith.constant 0 : i32
    %c0_i32_2 = arith.constant 0 : i32
    return %c0_i32, %c0_i32_0, %c0_i32_1 : i32, i32, i32
  }
  func.func @transform_6(%arg0: i32) -> (i32, i32, i32) {
    %c0_i32 = arith.constant 0 : i32
    %c0_i32_0 = arith.constant 0 : i32
    %c0_i32_1 = arith.constant 0 : i32
    %c0_i32_2 = arith.constant 0 : i32
    return %c0_i32, %c0_i32_0, %c0_i32_1 : i32, i32, i32
  }
  func.func @transform_7(%arg0: i32) -> (i32, i32, i32) {
    %c0_i32 = arith.constant 0 : i32
    %c0_i32_0 = arith.constant 0 : i32
    %c0_i32_1 = arith.constant 0 : i32
    %c0_i32_2 = arith.constant 0 : i32
    return %c0_i32, %c0_i32_0, %c0_i32_1 : i32, i32, i32
  }
  func.func @transform_8(%arg0: i32) -> (i32, i32, i32) {
    %c0_i32 = arith.constant 0 : i32
    %c0_i32_0 = arith.constant 0 : i32
    %c0_i32_1 = arith.constant 0 : i32
    %c0_i32_2 = arith.constant 0 : i32
    return %c0_i32, %c0_i32_0, %c0_i32_1 : i32, i32, i32
  }
  func.func @transform_9(%arg0: i32) -> (i32, i32, i32) {
    %c0_i32 = arith.constant 0 : i32
    %c0_i32_0 = arith.constant 0 : i32
    %c0_i32_1 = arith.constant 0 : i32
    %c0_i32_2 = arith.constant 0 : i32
    return %c0_i32, %c0_i32_0, %c0_i32_1 : i32, i32, i32
  }
  func.func @transform_10(%arg0: i32) -> (i32, i32) {
    %c0_i32 = arith.constant 0 : i32
    %c0_i32_0 = arith.constant 0 : i32
    return %arg0, %c0_i32 : i32, i32
  }
}

</mosaic_0001>

<llo_original>
// kernel: tpu_custom_call.1
$region0: #{tpu_custom_call.1}
  #allocation0 [shape = 'u32[]', space=smem, size = 0x4, offset = 0x4, fixed_abs, tag = 'smem constant byte address 0x4 - core index']
  #allocation1 [shape = 'u32[144,128]{1,0:T(1,128)}', space=vmem, size = 0x12000, scoped, tag = 'internal scratch']
  %s0 = inlined_call_operand.vmem [shape: f32[32,64], index: 0, kind: input, shape index: {}]
  %s1 = inlined_call_operand.vmem [shape: bf16[64,32], index: 1, kind: input, shape index: {}]
  %s2 = inlined_call_operand.vmem [shape: f32[32,32], index: 2, kind: input, shape index: {}]
  %s3 = inlined_call_operand.vmem [shape: bf16[2,32,96], index: 3, kind: input, shape index: {}]
  %s4 = inlined_call_operand.vmem [shape: f32[2,1,96], index: 4, kind: input, shape index: {}]
  %s5 = inlined_call_operand.vmem [shape: bf16[2,32,32], index: 5, kind: input, shape index: {}]
  %s6 = inlined_call_operand.hbm [shape: bf16[2,32,64], index: 6, kind: input, shape index: {}]
  %s7 = inlined_call_operand.vmem [shape: f32[2,1,64], index: 7, kind: input, shape index: {}]
  %s8 = inlined_call_operand.vmem [shape: bf16[2,64,32], index: 8, kind: input, shape index: {}]
  %s9 = inlined_call_operand.vmem [shape: f32[2,6,32], index: 9, kind: input, shape index: {}]
  %s10 = inlined_call_operand.hbm [shape: f32[32,32], index: 10, kind: output, shape index: {}]
  %s11 = sld [smem:[#allocation0]]
  $region61: #{tpu_custom_call.1} parent=0
    _
  %s13 = ssub.s32 1, %s11
  %s14 = scalar_select 0, %s13, %s11
  $region1: #{tpu_custom_call.1} parent=0
    #allocation2 [shape = 'u8[16384]{0}', space=vmem, size = 0x4000, scoped, tag = 'input window, operand 6, single buffered']
    #allocation3 [shape = 's32[1]{0}', space=sflag, size = 0x4, scoped, tag = 'scoped memory for tpu_custom_call.1']
    #allocation4 [shape = 's32[1]{0}', space=sflag, size = 0x4, scoped, tag = 'scoped memory for tpu_custom_call.1']
    #allocation5 [shape = 'u8[16384]{0}', space=vmem, size = 0x4000, scoped, tag = 'output window, operand 0, single buffered']
    %15 = vsyncpa [#allocation3], 0
    %16 = vsyncpa [#allocation4], 0
    // Predicated region
    $region2: #{tpu_custom_call.1} parent=1 // pred_check
      _
    $region3: #{tpu_custom_call.1} parent=1 // pred_check_branch
      %18 = sbr.rel (0) target = $region5
    $region4: #{tpu_custom_call.1} parent=1 // pred_region
      _
    $region5: #{tpu_custom_call.1} parent=1 // pred_fallthru
      _
    // Predicated region
    $region6: #{tpu_custom_call.1} parent=1 // pred_check
      _
    $region7: #{tpu_custom_call.1} parent=1 // pred_check_branch
      %20 = sbr.rel (0) target = $region9
    $region8: #{tpu_custom_call.1} parent=1 // pred_region
      _
    $region9: #{tpu_custom_call.1} parent=1 // pred_fallthru
      _
    // Predicated region
    $region10: #{tpu_custom_call.1} parent=1 // pred_check
      _
    $region11: #{tpu_custom_call.1} parent=1 // pred_check_branch
      %22 = sbr.rel (0) target = $region13
    $region12: #{tpu_custom_call.1} parent=1 // pred_region
      _
    $region13: #{tpu_custom_call.1} parent=1 // pred_fallthru
      _
    // Predicated region
    $region14: #{tpu_custom_call.1} parent=1 // pred_check
      _
    $region15: #{tpu_custom_call.1} parent=1 // pred_check_branch
      %24 = sbr.rel (0) target = $region17
    $region16: #{tpu_custom_call.1} parent=1 // pred_region
      _
    $region17: #{tpu_custom_call.1} parent=1 // pred_fallthru
      _
    // Predicated region
    $region18: #{tpu_custom_call.1} parent=1 // pred_check
      _
    $region19: #{tpu_custom_call.1} parent=1 // pred_check_branch
      %26 = sbr.rel (0) target = $region21
    $region20: #{tpu_custom_call.1} parent=1 // pred_region
      _
    $region21: #{tpu_custom_call.1} parent=1 // pred_fallthru
      _
    // Predicated region
    $region22: #{tpu_custom_call.1} parent=1 // pred_check
      _
    $region23: #{tpu_custom_call.1} parent=1 // pred_check_branch
      %28 = sbr.rel (0) target = $region25
    $region24: #{tpu_custom_call.1} parent=1 // pred_region
      _
    $region25: #{tpu_custom_call.1} parent=1 // pred_fallthru
      _
    // Predicated region
    $region26: #{tpu_custom_call.1} parent=1 // pred_check
      _
    $region27: #{tpu_custom_call.1} parent=1 // pred_check_branch
      %30 = sbr.rel (0) target = $region29
    $region28: #{tpu_custom_call.1} parent=1 // pred_region
      %s32 = ssub.s32 512, 512
      %33 = vsyncadd [#allocation3], %s32
      %s34 = sshll.u32 [#allocation2], 4
      %s35 = int_to_ptr.vmem [resolvable:$true] %s34
      %40 = dma.hbm_to_vmem [thread:$0]  %s6, 512, %s35, [#allocation3], 64, 64, 4
    $region29: #{tpu_custom_call.1} parent=1 // pred_fallthru
      _
    // Predicated region
    $region30: #{tpu_custom_call.1} parent=1 // pred_check
      _
    $region31: #{tpu_custom_call.1} parent=1 // pred_check_branch
      %42 = sbr.rel (0) target = $region33
    $region32: #{tpu_custom_call.1} parent=1 // pred_region
      _
    $region33: #{tpu_custom_call.1} parent=1 // pred_fallthru
      _
    // Predicated region
    $region34: #{tpu_custom_call.1} parent=1 // pred_check
      _
    $region35: #{tpu_custom_call.1} parent=1 // pred_check_branch
      %44 = sbr.rel (0) target = $region37
    $region36: #{tpu_custom_call.1} parent=1 // pred_region
      _
    $region37: #{tpu_custom_call.1} parent=1 // pred_fallthru
      _
    // Predicated region
    $region38: #{tpu_custom_call.1} parent=1 // pred_check
      _
    $region39: #{tpu_custom_call.1} parent=1 // pred_check_branch
      %46 = sbr.rel (0) target = $region41
    $region40: #{tpu_custom_call.1} parent=1 // pred_region
      _
    $region41: #{tpu_custom_call.1} parent=1 // pred_fallthru
      _
    // Predicated region
    $region42: #{tpu_custom_call.1} parent=1 // pred_check
      _
    $region43: #{tpu_custom_call.1} parent=1 // pred_check_branch
      %48 = sbr.rel (0) target = $region45
    $region44: #{tpu_custom_call.1} parent=1 // pred_region
      %49 = dma.done [#allocation3], 512
    $region45: #{tpu_custom_call.1} parent=1 // pred_fallthru
      _
    %v51 = vld [vmem:[%s0] sm:$0xff]
    %v52 = vld [vmem:[%s0 + $0x8] sm:$0xff]
    %v53 = vld [vmem:[%s0 + $0x10] sm:$0xff]
    %v54 = vld [vmem:[%s0 + $0x18] sm:$0xff]
    %v55 = vpack.c.bf16 %v52, %v51
    %v56 = vpack.c.bf16 %v54, %v53
    %v57 = vld [vmem:[%s1] sm:$0xf]
    %v58 = vld [vmem:[%s1 + $0x4] sm:$0xf]
    %v59 = vld [vmem:[%s1 + $0x8] sm:$0xf]
    %v60 = vld [vmem:[%s1 + $0xc] sm:$0xf]
    %v61 = vld [vmem:[%s1 + $0x10] sm:$0xf]
    %v62 = vld [vmem:[%s1 + $0x14] sm:$0xf]
    %v63 = vld [vmem:[%s1 + $0x18] sm:$0xf]
    %v64 = vld [vmem:[%s1 + $0x1c] sm:$0xf]
    %v65 = vld [vmem:[%s2] sm:$0xff]
    %v66 = vld [vmem:[%s2 + $0x8] sm:$0xff]
    %v67 = vld [vmem:[%s2 + $0x10] sm:$0xff]
    %v68 = vld [vmem:[%s2 + $0x18] sm:$0xff]
    %v77 = vunpack.c.l.b16 %v57
    %v78 = vunpack.c.l.b16 %v58
    %v79 = vunpack.c.l.b16 %v59
    %v80 = vunpack.c.l.b16 %v60
    %v81 = vunpack.c.l.b16 %v61
    %v82 = vunpack.c.l.b16 %v62
    %v83 = vunpack.c.l.b16 %v63
    %v84 = vunpack.c.l.b16 %v64
    %v85 = vpack.c.b16 %v78, %v77
    %v86 = vpack.c.b16 %v80, %v79
    %v87 = vpack.c.b16 %v82, %v81
    %v88 = vpack.c.b16 %v84, %v83
    %vm93 = vcmask 523264
    %v95 = vsel %vm93, %v55, 0
    %v98 = vsel %vm93, %v56, 0
    %100 = vmatprep.subr.bf16.mxu0 0
    %101 = vmatpush1.bf16.msra.mxu0 0
    %102 = vmatprep.subr.bf16.mxu0 0
    %103 = vmatpush1.bf16.msra.mxu0 0
    %104 = vmatprep.subr.bf16.mxu0 0
    %105 = vmatpush1.bf16.msra.mxu0 0
    %106 = vmatprep.subr.bf16.mxu0 0
    %107 = vmatpush1.bf16.msra.mxu0 0
    %108 = vmatprep.subr.bf16.mxu0 0
    %109 = vmatpush1.bf16.msra.mxu0 %v88
    %110 = vmatprep.subr.bf16.mxu0 0
    %111 = vmatpush1.bf16.msra.mxu0 %v87
    %112 = vmatprep.subr.bf16.mxu0 0
    %113 = vmatpush1.bf16.msra.mxu0 %v86
    %114 = vmatprep.subr.bf16.mxu0 0
    %115 = vmatpush1.bf16.msra.mxu0 %v85
    %116 = vmatprep.subr.bf16.mxu0 0
    %117 = vmatpush2.bf16.msra.mxu0 0
    %118 = vmatprep.subr.bf16.mxu0 0
    %119 = vmatpush2.bf16.msra.mxu0 0
    %120 = vmatprep.subr.bf16.mxu0 0
    %121 = vmatpush2.bf16.msra.mxu0 0
    %122 = vmatprep.subr.bf16.mxu0 0
    %123 = vmatpush2.bf16.msra.mxu0 0
    %124 = vmatprep.subr.bf16.mxu0 0
    %125 = vmatpush2.bf16.msra.mxu0 0
    %126 = vmatprep.subr.bf16.mxu0 0
    %127 = vmatpush2.bf16.msra.mxu0 0
    %128 = vmatprep.subr.bf16.mxu0 0
    %129 = vmatpush2.bf16.msra.mxu0 0
    %130 = vmatprep.subr.bf16.mxu0 0
    %131 = vmatpush2.bf16.msra.mxu0 0
    %132 = vmatprep.mubr.bf16.mxu0 0
    %133 = vmatmul.mubr.bf16.gmra.mxu0 %v95
    %v134 = vpop.f32.mrf.mxu0
    %v135 = vadd.f32 %v65, %v134
    %v136 = vpop.f32.mrf.mxu0
    %v137 = vpop.f32.mrf.mxu0
    %v138 = vadd.f32 %v66, %v137
    %v139 = vpop.f32.mrf.mxu0
    %140 = vmatprep.mubr.bf16.mxu0 0
    %141 = vmatmul.mubr.bf16.gmra.mxu0 %v98
    %v142 = vpop.f32.mrf.mxu0
    %v143 = vadd.f32 %v67, %v142
    %v144 = vpop.f32.mrf.mxu0
    %v145 = vpop.f32.mrf.mxu0
    %v146 = vadd.f32 %v68, %v145
    %v147 = vpop.f32.mrf.mxu0
    %148 = vdwg.mxu0
    loop: start=0, step=1, limit=2
    $region46: #{tpu_custom_call.1} parent=1 // loop_pre_header
      _
    $region47: #{tpu_custom_call.1} parent=1 // loop_header
      %s150 = sphi 0, %s154
      %p151 = scmp.ge.s32.totalorder %s150, 2
      %v155 = vphi %v135, %v1720
      %v156 = vphi %v138, %v1721
      %v157 = vphi %v143, %v1722
      %v158 = vphi %v146, %v1723
    $region48: #{tpu_custom_call.1} parent=1 // loop_header_branch
      %153 = sbr.rel (%p151) target = $region52
    $region49: #{tpu_custom_call.1} parent=1 // loop_body
      %v159 = vpack.c.bf16 %v156, %v155
      %v160 = vpack.c.bf16 %v158, %v157
      %s161 = smul.u32 %s150, 4
      %s162 = smul.addr %s161, 4
      %s163 = scalar_lea.vmem %s3, %s162
      %v164 = vld [vmem:[%s163] sm:$0xf]
      %v165 = vld [vmem:[%s163 + $0x4] sm:$0xf]
      %v166 = vld [vmem:[%s163 + $0x8] sm:$0xf]
      %v167 = vld [vmem:[%s163 + $0xc] sm:$0xf]
      %s168 = scalar_lea.vmem %s4, %s150
      %v169 = vld [vmem:[%s168] sm:$0x1]
      %v171 = vlaneseq
      %v172 = vshrl.u32 %v171, 7
      %v173 = vsub.s32 0, %v172
      %v174 = vrot.slane %v169, %v173
      %v180 = vunpack.c.l.b16 %v164
      %v181 = vunpack.c.l.b16 %v165
      %v182 = vunpack.c.l.b16 %v166
      %v183 = vunpack.c.l.b16 %v167
      %v184 = vpack.c.b16 %v181, %v180
      %v185 = vpack.c.b16 %v183, %v182
      %vm188 = vcmask 261120
      %v190 = vsel %vm188, %v159, 0
      %v193 = vsel %vm188, %v160, 0
      %195 = vmatprep.subr.bf16.mxu0 0
      %196 = vmatpush1.bf16.msra.mxu0 0
      %197 = vmatprep.subr.bf16.mxu0 0
      %198 = vmatpush1.bf16.msra.mxu0 0
      %199 = vmatprep.subr.bf16.mxu0 0
      %200 = vmatpush1.bf16.msra.mxu0 0
      %201 = vmatprep.subr.bf16.mxu0 0
      %202 = vmatpush1.bf16.msra.mxu0 0
      %203 = vmatprep.subr.bf16.mxu0 0
      %204 = vmatpush1.bf16.msra.mxu0 0
      %205 = vmatprep.subr.bf16.mxu0 0
      %206 = vmatpush1.bf16.msra.mxu0 0
      %207 = vmatprep.subr.bf16.mxu0 0
      %208 = vmatpush1.bf16.msra.mxu0 %v185
      %209 = vmatprep.subr.bf16.mxu0 0
      %210 = vmatpush1.bf16.msra.mxu0 %v184
      %211 = vmatprep.subr.bf16.mxu0 0
      %212 = vmatpush2.bf16.msra.mxu0 0
      %213 = vmatprep.subr.bf16.mxu0 0
      %214 = vmatpush2.bf16.msra.mxu0 0
      %215 = vmatprep.subr.bf16.mxu0 0
      %216 = vmatpush2.bf16.msra.mxu0 0
      %217 = vmatprep.subr.bf16.mxu0 0
      %218 = vmatpush2.bf16.msra.mxu0 0
      %219 = vmatprep.subr.bf16.mxu0 0
      %220 = vmatpush2.bf16.msra.mxu0 0
      %221 = vmatprep.subr.bf16.mxu0 0
      %222 = vmatpush2.bf16.msra.mxu0 0
      %223 = vmatprep.subr.bf16.mxu0 0
      %224 = vmatpush2.bf16.msra.mxu0 0
      %225 = vmatprep.subr.bf16.mxu0 0
      %226 = vmatpush2.bf16.msra.mxu0 0
      %227 = vmatprep.mubr.bf16.mxu0 0
      %228 = vmatmul.mubr.bf16.gmra.mxu0 %v190
      %v229 = vpop.f32.mrf.mxu0
      %v230 = vadd.f32 %v174, %v229
      %v231 = vpop.f32.mrf.mxu0
      %v232 = vpop.f32.mrf.mxu0
      %v233 = vadd.f32 %v174, %v232
      %v234 = vpop.f32.mrf.mxu0
      %235 = vmatprep.mubr.bf16.mxu0 0
      %236 = vmatmul.mubr.bf16.gmra.mxu0 %v193
      %v237 = vpop.f32.mrf.mxu0
      %v238 = vadd.f32 %v174, %v237
      %v239 = vpop.f32.mrf.mxu0
      %v240 = vpop.f32.mrf.mxu0
      %v241 = vadd.f32 %v174, %v240
      %v242 = vpop.f32.mrf.mxu0
      %243 = vdwg.mxu0
      %248 = vrot.lane.b32.xlu0 %v230, 120
      %v249 = vpop.permute.xlu0 %248
      %250 = vrot.lane.b32.xlu0 %v233, 120
      %v251 = vpop.permute.xlu0 %250
      %252 = vrot.lane.b32.xlu0 %v238, 120
      %v253 = vpop.permute.xlu0 %252
      %254 = vrot.lane.b32.xlu0 %v241, 120
      %v255 = vpop.permute.xlu0 %254
      %260 = vrot.lane.b32.xlu0 %v230, 112
      %v261 = vpop.permute.xlu0 %260
      %262 = vrot.lane.b32.xlu0 %v233, 112
      %v263 = vpop.permute.xlu0 %262
      %264 = vrot.lane.b32.xlu0 %v238, 112
      %v265 = vpop.permute.xlu0 %264
      %266 = vrot.lane.b32.xlu0 %v241, 112
      %v267 = vpop.permute.xlu0 %266
      %272 = vrot.lane.b32.xlu0 %v230, 104
      %v273 = vpop.permute.xlu0 %272
      %274 = vrot.lane.b32.xlu0 %v233, 104
      %v275 = vpop.permute.xlu0 %274
      %276 = vrot.lane.b32.xlu0 %v238, 104
      %v277 = vpop.permute.xlu0 %276
      %278 = vrot.lane.b32.xlu0 %v241, 104
      %v279 = vpop.permute.xlu0 %278
      %v284 = vpack.c.bf16 %v233, %v230
      %v285 = vpack.c.bf16 %v241, %v238
      %v286 = vpack.c.bf16 %v251, %v249
      %v287 = vpack.c.bf16 %v255, %v253
      %v288 = vpack.c.bf16 %v263, %v261
      %v289 = vpack.c.bf16 %v267, %v265
      %v290 = vpack.c.bf16 %v275, %v273
      %v291 = vpack.c.bf16 %v279, %v277
      %293 = vrot.lane.b32.xlu0 %v284, 96
      %v294 = vpop.permute.xlu0 %293
      %vm295 = vcmask 64512
      %v297 = vsel %vm295, %v284, 0
      %v300 = vsel %vm295, %v294, 0
      %302 = vmatprep.subr.bf16.mxu0 0
      %303 = vmatpush1.bf16.xpose.msra.mxu0 0
      %304 = vmatprep.subr.bf16.mxu0 0
      %305 = vmatpush1.bf16.xpose.msra.mxu0 0
      %306 = vmatprep.subr.bf16.mxu0 0
      %307 = vmatpush1.bf16.xpose.msra.mxu0 0
      %308 = vmatprep.subr.bf16.mxu0 0
      %309 = vmatpush1.bf16.xpose.msra.mxu0 0
      %310 = vmatprep.subr.bf16.mxu0 0
      %311 = vmatpush1.bf16.xpose.msra.mxu0 0
      %312 = vmatprep.subr.bf16.mxu0 0
      %313 = vmatpush1.bf16.xpose.msra.mxu0 0
      %314 = vmatprep.subr.bf16.mxu0 0
      %315 = vmatpush1.bf16.xpose.msra.mxu0 0
      %316 = vmatprep.subr.bf16.mxu0 0
      %317 = vmatpush1.bf16.xpose.msra.mxu0 %v300
      %318 = vmatprep.subr.bf16.mxu0 0
      %319 = vmatpush2.bf16.xpose.msra.mxu0 0
      %320 = vmatprep.subr.bf16.mxu0 0
      %321 = vmatpush2.bf16.xpose.msra.mxu0 0
      %322 = vmatprep.subr.bf16.mxu0 0
      %323 = vmatpush2.bf16.xpose.msra.mxu0 0
      %324 = vmatprep.subr.bf16.mxu0 0
      %325 = vmatpush2.bf16.xpose.msra.mxu0 0
      %326 = vmatprep.subr.bf16.mxu0 0
      %327 = vmatpush2.bf16.xpose.msra.mxu0 0
      %328 = vmatprep.subr.bf16.mxu0 0
      %329 = vmatpush2.bf16.xpose.msra.mxu0 0
      %330 = vmatprep.subr.bf16.mxu0 0
      %331 = vmatpush2.bf16.xpose.msra.mxu0 0
      %332 = vmatprep.subr.bf16.mxu0 0
      %333 = vmatpush2.bf16.xpose.msra.mxu0 0
      %334 = vmatprep.mubr.bf16.mxu0 0
      %335 = vmatmul.mubr.bf16.gmra.mxu0 %v297
      %v336 = vpop.f32.mrf.mxu0
      %v337 = vadd.f32 0.0, %v336
      %v338 = vpop.f32.mrf.mxu0
      %v339 = vpop.f32.mrf.mxu0
      %v340 = vadd.f32 0.0, %v339
      %v341 = vpop.f32.mrf.mxu0
      %342 = vdwg.mxu0
      %344 = vrot.lane.b32.xlu0 %v285, 96
      %v345 = vpop.permute.xlu0 %344
      %v347 = vsel %vm295, %v285, 0
      %v350 = vsel %vm295, %v345, 0
      %352 = vmatprep.subr.bf16.mxu0 0
      %353 = vmatpush1.bf16.xpose.msra.mxu0 0
      %354 = vmatprep.subr.bf16.mxu0 0
      %355 = vmatpush1.bf16.xpose.msra.mxu0 0
      %356 = vmatprep.subr.bf16.mxu0 0
      %357 = vmatpush1.bf16.xpose.msra.mxu0 0
      %358 = vmatprep.subr.bf16.mxu0 0
      %359 = vmatpush1.bf16.xpose.msra.mxu0 0
      %360 = vmatprep.subr.bf16.mxu0 0
      %361 = vmatpush1.bf16.xpose.msra.mxu0 0
      %362 = vmatprep.subr.bf16.mxu0 0
      %363 = vmatpush1.bf16.xpose.msra.mxu0 0
      %364 = vmatprep.subr.bf16.mxu0 0
      %365 = vmatpush1.bf16.xpose.msra.mxu0 0
      %366 = vmatprep.subr.bf16.mxu0 0
      %367 = vmatpush1.bf16.xpose.msra.mxu0 %v350
      %368 = vmatprep.subr.bf16.mxu0 0
      %369 = vmatpush2.bf16.xpose.msra.mxu0 0
      %370 = vmatprep.subr.bf16.mxu0 0
      %371 = vmatpush2.bf16.xpose.msra.mxu0 0
      %372 = vmatprep.subr.bf16.mxu0 0
      %373 = vmatpush2.bf16.xpose.msra.mxu0 0
      %374 = vmatprep.subr.bf16.mxu0 0
      %375 = vmatpush2.bf16.xpose.msra.mxu0 0
      %376 = vmatprep.subr.bf16.mxu0 0
      %377 = vmatpush2.bf16.xpose.msra.mxu0 0
      %378 = vmatprep.subr.bf16.mxu0 0
      %379 = vmatpush2.bf16.xpose.msra.mxu0 0
      %380 = vmatprep.subr.bf16.mxu0 0
      %381 = vmatpush2.bf16.xpose.msra.mxu0 0
      %382 = vmatprep.subr.bf16.mxu0 0
      %383 = vmatpush2.bf16.xpose.msra.mxu0 0
      %384 = vmatprep.mubr.bf16.mxu0 0
      %385 = vmatmul.mubr.bf16.gmra.mxu0 %v347
      %v386 = vpop.f32.mrf.mxu0
      %v387 = vadd.f32 0.0, %v386
      %v388 = vpop.f32.mrf.mxu0
      %v389 = vpop.f32.mrf.mxu0
      %v390 = vadd.f32 0.0, %v389
      %v391 = vpop.f32.mrf.mxu0
      %392 = vdwg.mxu0
      %394 = vrot.lane.b32.xlu0 %v286, 96
      %v395 = vpop.permute.xlu0 %394
      %v397 = vsel %vm295, %v286, 0
      %v400 = vsel %vm295, %v395, 0
      %402 = vmatprep.subr.bf16.mxu0 0
      %403 = vmatpush1.bf16.xpose.msra.mxu0 0
      %404 = vmatprep.subr.bf16.mxu0 0
      %405 = vmatpush1.bf16.xpose.msra.mxu0 0
      %406 = vmatprep.subr.bf16.mxu0 0
      %407 = vmatpush1.bf16.xpose.msra.mxu0 0
      %408 = vmatprep.subr.bf16.mxu0 0
      %409 = vmatpush1.bf16.xpose.msra.mxu0 0
      %410 = vmatprep.subr.bf16.mxu0 0
      %411 = vmatpush1.bf16.xpose.msra.mxu0 0
      %412 = vmatprep.subr.bf16.mxu0 0
      %413 = vmatpush1.bf16.xpose.msra.mxu0 0
      %414 = vmatprep.subr.bf16.mxu0 0
      %415 = vmatpush1.bf16.xpose.msra.mxu0 0
      %416 = vmatprep.subr.bf16.mxu0 0
      %417 = vmatpush1.bf16.xpose.msra.mxu0 %v400
      %418 = vmatprep.subr.bf16.mxu0 0
      %419 = vmatpush2.bf16.xpose.msra.mxu0 0
      %420 = vmatprep.subr.bf16.mxu0 0
      %421 = vmatpush2.bf16.xpose.msra.mxu0 0
      %422 = vmatprep.subr.bf16.mxu0 0
      %423 = vmatpush2.bf16.xpose.msra.mxu0 0
      %424 = vmatprep.subr.bf16.mxu0 0
      %425 = vmatpush2.bf16.xpose.msra.mxu0 0
      %426 = vmatprep.subr.bf16.mxu0 0
      %427 = vmatpush2.bf16.xpose.msra.mxu0 0
      %428 = vmatprep.subr.bf16.mxu0 0
      %429 = vmatpush2.bf16.xpose.msra.mxu0 0
      %430 = vmatprep.subr.bf16.mxu0 0
      %431 = vmatpush2.bf16.xpose.msra.mxu0 0
      %432 = vmatprep.subr.bf16.mxu0 0
      %433 = vmatpush2.bf16.xpose.msra.mxu0 0
      %434 = vmatprep.mubr.bf16.mxu0 0
      %435 = vmatmul.mubr.bf16.gmra.mxu0 %v397
      %v436 = vpop.f32.mrf.mxu0
      %v437 = vadd.f32 0.0, %v436
      %v438 = vpop.f32.mrf.mxu0
      %v439 = vpop.f32.mrf.mxu0
      %v440 = vadd.f32 0.0, %v439
      %v441 = vpop.f32.mrf.mxu0
      %442 = vdwg.mxu0
      %444 = vrot.lane.b32.xlu0 %v287, 96
      %v445 = vpop.permute.xlu0 %444
      %v447 = vsel %vm295, %v287, 0
      %v450 = vsel %vm295, %v445, 0
      %452 = vmatprep.subr.bf16.mxu0 0
      %453 = vmatpush1.bf16.xpose.msra.mxu0 0
      %454 = vmatprep.subr.bf16.mxu0 0
      %455 = vmatpush1.bf16.xpose.msra.mxu0 0
      %456 = vmatprep.subr.bf16.mxu0 0
      %457 = vmatpush1.bf16.xpose.msra.mxu0 0
      %458 = vmatprep.subr.bf16.mxu0 0
      %459 = vmatpush1.bf16.xpose.msra.mxu0 0
      %460 = vmatprep.subr.bf16.mxu0 0
      %461 = vmatpush1.bf16.xpose.msra.mxu0 0
      %462 = vmatprep.subr.bf16.mxu0 0
      %463 = vmatpush1.bf16.xpose.msra.mxu0 0
      %464 = vmatprep.subr.bf16.mxu0 0
      %465 = vmatpush1.bf16.xpose.msra.mxu0 0
      %466 = vmatprep.subr.bf16.mxu0 0
      %467 = vmatpush1.bf16.xpose.msra.mxu0 %v450
      %468 = vmatprep.subr.bf16.mxu0 0
      %469 = vmatpush2.bf16.xpose.msra.mxu0 0
      %470 = vmatprep.subr.bf16.mxu0 0
      %471 = vmatpush2.bf16.xpose.msra.mxu0 0
      %472 = vmatprep.subr.bf16.mxu0 0
      %473 = vmatpush2.bf16.xpose.msra.mxu0 0
      %474 = vmatprep.subr.bf16.mxu0 0
      %475 = vmatpush2.bf16.xpose.msra.mxu0 0
      %476 = vmatprep.subr.bf16.mxu0 0
      %477 = vmatpush2.bf16.xpose.msra.mxu0 0
      %478 = vmatprep.subr.bf16.mxu0 0
      %479 = vmatpush2.bf16.xpose.msra.mxu0 0
      %480 = vmatprep.subr.bf16.mxu0 0
      %481 = vmatpush2.bf16.xpose.msra.mxu0 0
      %482 = vmatprep.subr.bf16.mxu0 0
      %483 = vmatpush2.bf16.xpose.msra.mxu0 0
      %484 = vmatprep.mubr.bf16.mxu0 0
      %485 = vmatmul.mubr.bf16.gmra.mxu0 %v447
      %v486 = vpop.f32.mrf.mxu0
      %v487 = vadd.f32 0.0, %v486
      %v488 = vpop.f32.mrf.mxu0
      %v489 = vpop.f32.mrf.mxu0
      %v490 = vadd.f32 0.0, %v489
      %v491 = vpop.f32.mrf.mxu0
      %492 = vdwg.mxu0
      %494 = vrot.lane.b32.xlu0 %v288, 96
      %v495 = vpop.permute.xlu0 %494
      %v497 = vsel %vm295, %v288, 0
      %v500 = vsel %vm295, %v495, 0
      %502 = vmatprep.subr.bf16.mxu0 0
      %503 = vmatpush1.bf16.xpose.msra.mxu0 0
      %504 = vmatprep.subr.bf16.mxu0 0
      %505 = vmatpush1.bf16.xpose.msra.mxu0 0
      %506 = vmatprep.subr.bf16.mxu0 0
      %507 = vmatpush1.bf16.xpose.msra.mxu0 0
      %508 = vmatprep.subr.bf16.mxu0 0
      %509 = vmatpush1.bf16.xpose.msra.mxu0 0
      %510 = vmatprep.subr.bf16.mxu0 0
      %511 = vmatpush1.bf16.xpose.msra.mxu0 0
      %512 = vmatprep.subr.bf16.mxu0 0
      %513 = vmatpush1.bf16.xpose.msra.mxu0 0
      %514 = vmatprep.subr.bf16.mxu0 0
      %515 = vmatpush1.bf16.xpose.msra.mxu0 0
      %516 = vmatprep.subr.bf16.mxu0 0
      %517 = vmatpush1.bf16.xpose.msra.mxu0 %v500
      %518 = vmatprep.subr.bf16.mxu0 0
      %519 = vmatpush2.bf16.xpose.msra.mxu0 0
      %520 = vmatprep.subr.bf16.mxu0 0
      %521 = vmatpush2.bf16.xpose.msra.mxu0 0
      %522 = vmatprep.subr.bf16.mxu0 0
      %523 = vmatpush2.bf16.xpose.msra.mxu0 0
      %524 = vmatprep.subr.bf16.mxu0 0
      %525 = vmatpush2.bf16.xpose.msra.mxu0 0
      %526 = vmatprep.subr.bf16.mxu0 0
      %527 = vmatpush2.bf16.xpose.msra.mxu0 0
      %528 = vmatprep.subr.bf16.mxu0 0
      %529 = vmatpush2.bf16.xpose.msra.mxu0 0
      %530 = vmatprep.subr.bf16.mxu0 0
      %531 = vmatpush2.bf16.xpose.msra.mxu0 0
      %532 = vmatprep.subr.bf16.mxu0 0
      %533 = vmatpush2.bf16.xpose.msra.mxu0 0
      %534 = vmatprep.mubr.bf16.mxu0 0
      %535 = vmatmul.mubr.bf16.gmra.mxu0 %v497
      %v536 = vpop.f32.mrf.mxu0
      %v537 = vadd.f32 0.0, %v536
      %v538 = vpop.f32.mrf.mxu0
      %v539 = vpop.f32.mrf.mxu0
      %v540 = vadd.f32 0.0, %v539
      %v541 = vpop.f32.mrf.mxu0
      %542 = vdwg.mxu0
      %544 = vrot.lane.b32.xlu0 %v289, 96
      %v545 = vpop.permute.xlu0 %544
      %v547 = vsel %vm295, %v289, 0
      %v550 = vsel %vm295, %v545, 0
      %552 = vmatprep.subr.bf16.mxu0 0
      %553 = vmatpush1.bf16.xpose.msra.mxu0 0
      %554 = vmatprep.subr.bf16.mxu0 0
      %555 = vmatpush1.bf16.xpose.msra.mxu0 0
      %556 = vmatprep.subr.bf16.mxu0 0
      %557 = vmatpush1.bf16.xpose.msra.mxu0 0
      %558 = vmatprep.subr.bf16.mxu0 0
      %559 = vmatpush1.bf16.xpose.msra.mxu0 0
      %560 = vmatprep.subr.bf16.mxu0 0
      %561 = vmatpush1.bf16.xpose.msra.mxu0 0
      %562 = vmatprep.subr.bf16.mxu0 0
      %563 = vmatpush1.bf16.xpose.msra.mxu0 0
      %564 = vmatprep.subr.bf16.mxu0 0
      %565 = vmatpush1.bf16.xpose.msra.mxu0 0
      %566 = vmatprep.subr.bf16.mxu0 0
      %567 = vmatpush1.bf16.xpose.msra.mxu0 %v550
      %568 = vmatprep.subr.bf16.mxu0 0
      %569 = vmatpush2.bf16.xpose.msra.mxu0 0
      %570 = vmatprep.subr.bf16.mxu0 0
      %571 = vmatpush2.bf16.xpose.msra.mxu0 0
      %572 = vmatprep.subr.bf16.mxu0 0
      %573 = vmatpush2.bf16.xpose.msra.mxu0 0
      %574 = vmatprep.subr.bf16.mxu0 0
      %575 = vmatpush2.bf16.xpose.msra.mxu0 0
      %576 = vmatprep.subr.bf16.mxu0 0
      %577 = vmatpush2.bf16.xpose.msra.mxu0 0
      %578 = vmatprep.subr.bf16.mxu0 0
      %579 = vmatpush2.bf16.xpose.msra.mxu0 0
      %580 = vmatprep.subr.bf16.mxu0 0
      %581 = vmatpush2.bf16.xpose.msra.mxu0 0
      %582 = vmatprep.subr.bf16.mxu0 0
      %583 = vmatpush2.bf16.xpose.msra.mxu0 0
      %584 = vmatprep.mubr.bf16.mxu0 0
      %585 = vmatmul.mubr.bf16.gmra.mxu0 %v547
      %v586 = vpop.f32.mrf.mxu0
      %v587 = vadd.f32 0.0, %v586
      %v588 = vpop.f32.mrf.mxu0
      %v589 = vpop.f32.mrf.mxu0
      %v590 = vadd.f32 0.0, %v589
      %v591 = vpop.f32.mrf.mxu0
      %592 = vdwg.mxu0
      %594 = vrot.lane.b32.xlu0 %v290, 96
      %v595 = vpop.permute.xlu0 %594
      %v597 = vsel %vm295, %v290, 0
      %v600 = vsel %vm295, %v595, 0
      %602 = vmatprep.subr.bf16.mxu0 0
      %603 = vmatpush1.bf16.xpose.msra.mxu0 0
      %604 = vmatprep.subr.bf16.mxu0 0
      %605 = vmatpush1.bf16.xpose.msra.mxu0 0
      %606 = vmatprep.subr.bf16.mxu0 0
      %607 = vmatpush1.bf16.xpose.msra.mxu0 0
      %608 = vmatprep.subr.bf16.mxu0 0
      %609 = vmatpush1.bf16.xpose.msra.mxu0 0
      %610 = vmatprep.subr.bf16.mxu0 0
      %611 = vmatpush1.bf16.xpose.msra.mxu0 0
      %612 = vmatprep.subr.bf16.mxu0 0
      %613 = vmatpush1.bf16.xpose.msra.mxu0 0
      %614 = vmatprep.subr.bf16.mxu0 0
      %615 = vmatpush1.bf16.xpose.msra.mxu0 0
      %616 = vmatprep.subr.bf16.mxu0 0
      %617 = vmatpush1.bf16.xpose.msra.mxu0 %v600
      %618 = vmatprep.subr.bf16.mxu0 0
      %619 = vmatpush2.bf16.xpose.msra.mxu0 0
      %620 = vmatprep.subr.bf16.mxu0 0
      %621 = vmatpush2.bf16.xpose.msra.mxu0 0
      %622 = vmatprep.subr.bf16.mxu0 0
      %623 = vmatpush2.bf16.xpose.msra.mxu0 0
      %624 = vmatprep.subr.bf16.mxu0 0
      %625 = vmatpush2.bf16.xpose.msra.mxu0 0
      %626 = vmatprep.subr.bf16.mxu0 0
      %627 = vmatpush2.bf16.xpose.msra.mxu0 0
      %628 = vmatprep.subr.bf16.mxu0 0
      %629 = vmatpush2.bf16.xpose.msra.mxu0 0
      %630 = vmatprep.subr.bf16.mxu0 0
      %631 = vmatpush2.bf16.xpose.msra.mxu0 0
      %632 = vmatprep.subr.bf16.mxu0 0
      %633 = vmatpush2.bf16.xpose.msra.mxu0 0
      %634 = vmatprep.mubr.bf16.mxu0 0
      %635 = vmatmul.mubr.bf16.gmra.mxu0 %v597
      %v636 = vpop.f32.mrf.mxu0
      %v637 = vadd.f32 0.0, %v636
      %v638 = vpop.f32.mrf.mxu0
      %v639 = vpop.f32.mrf.mxu0
      %v640 = vadd.f32 0.0, %v639
      %v641 = vpop.f32.mrf.mxu0
      %642 = vdwg.mxu0
      %644 = vrot.lane.b32.xlu0 %v291, 96
      %v645 = vpop.permute.xlu0 %644
      %v647 = vsel %vm295, %v291, 0
      %v650 = vsel %vm295, %v645, 0
      %652 = vmatprep.subr.bf16.mxu0 0
      %653 = vmatpush1.bf16.xpose.msra.mxu0 0
      %654 = vmatprep.subr.bf16.mxu0 0
      %655 = vmatpush1.bf16.xpose.msra.mxu0 0
      %656 = vmatprep.subr.bf16.mxu0 0
      %657 = vmatpush1.bf16.xpose.msra.mxu0 0
      %658 = vmatprep.subr.bf16.mxu0 0
      %659 = vmatpush1.bf16.xpose.msra.mxu0 0
      %660 = vmatprep.subr.bf16.mxu0 0
      %661 = vmatpush1.bf16.xpose.msra.mxu0 0
      %662 = vmatprep.subr.bf16.mxu0 0
      %663 = vmatpush1.bf16.xpose.msra.mxu0 0
      %664 = vmatprep.subr.bf16.mxu0 0
      %665 = vmatpush1.bf16.xpose.msra.mxu0 0
      %666 = vmatprep.subr.bf16.mxu0 0
      %667 = vmatpush1.bf16.xpose.msra.mxu0 %v650
      %668 = vmatprep.subr.bf16.mxu0 0
      %669 = vmatpush2.bf16.xpose.msra.mxu0 0
      %670 = vmatprep.subr.bf16.mxu0 0
      %671 = vmatpush2.bf16.xpose.msra.mxu0 0
      %672 = vmatprep.subr.bf16.mxu0 0
      %673 = vmatpush2.bf16.xpose.msra.mxu0 0
      %674 = vmatprep.subr.bf16.mxu0 0
      %675 = vmatpush2.bf16.xpose.msra.mxu0 0
      %676 = vmatprep.subr.bf16.mxu0 0
      %677 = vmatpush2.bf16.xpose.msra.mxu0 0
      %678 = vmatprep.subr.bf16.mxu0 0
      %679 = vmatpush2.bf16.xpose.msra.mxu0 0
      %680 = vmatprep.subr.bf16.mxu0 0
      %681 = vmatpush2.bf16.xpose.msra.mxu0 0
      %682 = vmatprep.subr.bf16.mxu0 0
      %683 = vmatpush2.bf16.xpose.msra.mxu0 0
      %684 = vmatprep.mubr.bf16.mxu0 0
      %685 = vmatmul.mubr.bf16.gmra.mxu0 %v647
      %v686 = vpop.f32.mrf.mxu0
      %v687 = vadd.f32 0.0, %v686
      %v688 = vpop.f32.mrf.mxu0
      %v689 = vpop.f32.mrf.mxu0
      %v690 = vadd.f32 0.0, %v689
      %v691 = vpop.f32.mrf.mxu0
      %692 = vdwg.mxu0
      %vm693 = vcmask 130048
      %v694 = vsel %vm693, %v337, -inf
      %695 = vmax.xlane.f32.xlu0 %v694
      %v696 = vpop.xlane.xlu0 %695
      %v697 = vsel %vm693, %v340, -inf
      %698 = vmax.xlane.f32.xlu0 %v697
      %v699 = vpop.xlane.xlu0 %698
      %v700 = vsel %vm693, %v387, -inf
      %701 = vmax.xlane.f32.xlu0 %v700
      %v702 = vpop.xlane.xlu0 %701
      %v703 = vsel %vm693, %v390, -inf
      %704 = vmax.xlane.f32.xlu0 %v703
      %v705 = vpop.xlane.xlu0 %704
      %v706 = vsel %vm693, %v437, -inf
      %707 = vmax.xlane.f32.xlu0 %v706
      %v708 = vpop.xlane.xlu0 %707
      %v709 = vsel %vm693, %v440, -inf
      %710 = vmax.xlane.f32.xlu0 %v709
      %v711 = vpop.xlane.xlu0 %710
      %v712 = vsel %vm693, %v487, -inf
      %713 = vmax.xlane.f32.xlu0 %v712
      %v714 = vpop.xlane.xlu0 %713
      %v715 = vsel %vm693, %v490, -inf
      %716 = vmax.xlane.f32.xlu0 %v715
      %v717 = vpop.xlane.xlu0 %716
      %v718 = vsel %vm693, %v537, -inf
      %719 = vmax.xlane.f32.xlu0 %v718
      %v720 = vpop.xlane.xlu0 %719
      %v721 = vsel %vm693, %v540, -inf
      %722 = vmax.xlane.f32.xlu0 %v721
      %v723 = vpop.xlane.xlu0 %722
      %v724 = vsel %vm693, %v587, -inf
      %725 = vmax.xlane.f32.xlu0 %v724
      %v726 = vpop.xlane.xlu0 %725
      %v727 = vsel %vm693, %v590, -inf
      %728 = vmax.xlane.f32.xlu0 %v727
      %v729 = vpop.xlane.xlu0 %728
      %v730 = vsel %vm693, %v637, -inf
      %731 = vmax.xlane.f32.xlu0 %v730
      %v732 = vpop.xlane.xlu0 %731
      %v733 = vsel %vm693, %v640, -inf
      %734 = vmax.xlane.f32.xlu0 %v733
      %v735 = vpop.xlane.xlu0 %734
      %v736 = vsel %vm693, %v687, -inf
      %737 = vmax.xlane.f32.xlu0 %v736
      %v738 = vpop.xlane.xlu0 %737
      %v739 = vsel %vm693, %v690, -inf
      %740 = vmax.xlane.f32.xlu0 %v739
      %v741 = vpop.xlane.xlu0 %740
      %v742 = vsub.f32 %v337, %v696
      %v743 = vsub.f32 %v340, %v699
      %v744 = vsub.f32 %v387, %v702
      %v745 = vsub.f32 %v390, %v705
      %v746 = vsub.f32 %v437, %v708
      %v747 = vsub.f32 %v440, %v711
      %v748 = vsub.f32 %v487, %v714
      %v749 = vsub.f32 %v490, %v717
      %v750 = vsub.f32 %v537, %v720
      %v751 = vsub.f32 %v540, %v723
      %v752 = vsub.f32 %v587, %v726
      %v753 = vsub.f32 %v590, %v729
      %v754 = vsub.f32 %v637, %v732
      %v755 = vsub.f32 %v640, %v735
      %v756 = vsub.f32 %v687, %v738
      %v757 = vsub.f32 %v690, %v741
      %v758 = vmul.f32 %v742, 1.442695
      %v759 = vpow.pop %v758
      %v760 = vmul.f32 %v743, 1.442695
      %v761 = vpow.pop %v760
      %v762 = vmul.f32 %v744, 1.442695
      %v763 = vpow.pop %v762
      %v764 = vmul.f32 %v745, 1.442695
      %v765 = vpow.pop %v764
      %v766 = vmul.f32 %v746, 1.442695
      %v767 = vpow.pop %v766
      %v768 = vmul.f32 %v747, 1.442695
      %v769 = vpow.pop %v768
      %v770 = vmul.f32 %v748, 1.442695
      %v771 = vpow.pop %v770
      %v772 = vmul.f32 %v749, 1.442695
      %v773 = vpow.pop %v772
      %v774 = vmul.f32 %v750, 1.442695
      %v775 = vpow.pop %v774
      %v776 = vmul.f32 %v751, 1.442695
      %v777 = vpow.pop %v776
      %v778 = vmul.f32 %v752, 1.442695
      %v779 = vpow.pop %v778
      %v780 = vmul.f32 %v753, 1.442695
      %v781 = vpow.pop %v780
      %v782 = vmul.f32 %v754, 1.442695
      %v783 = vpow.pop %v782
      %v784 = vmul.f32 %v755, 1.442695
      %v785 = vpow.pop %v784
      %v786 = vmul.f32 %v756, 1.442695
      %v787 = vpow.pop %v786
      %v788 = vmul.f32 %v757, 1.442695
      %v789 = vpow.pop %v788
      %v790 = vsel %vm693, %v759, 0.0
      %791 = vadd.xlane.f32.xlu0 %v790
      %v792 = vpop.xlane.xlu0 %791
      %v793 = vsel %vm693, %v761, 0.0
      %794 = vadd.xlane.f32.xlu0 %v793
      %v795 = vpop.xlane.xlu0 %794
      %v796 = vsel %vm693, %v763, 0.0
      %797 = vadd.xlane.f32.xlu0 %v796
      %v798 = vpop.xlane.xlu0 %797
      %v799 = vsel %vm693, %v765, 0.0
      %800 = vadd.xlane.f32.xlu0 %v799
      %v801 = vpop.xlane.xlu0 %800
      %v802 = vsel %vm693, %v767, 0.0
      %803 = vadd.xlane.f32.xlu0 %v802
      %v804 = vpop.xlane.xlu0 %803
      %v805 = vsel %vm693, %v769, 0.0
      %806 = vadd.xlane.f32.xlu0 %v805
      %v807 = vpop.xlane.xlu0 %806
      %v808 = vsel %vm693, %v771, 0.0
      %809 = vadd.xlane.f32.xlu0 %v808
      %v810 = vpop.xlane.xlu0 %809
      %v811 = vsel %vm693, %v773, 0.0
      %812 = vadd.xlane.f32.xlu0 %v811
      %v813 = vpop.xlane.xlu0 %812
      %v814 = vsel %vm693, %v775, 0.0
      %815 = vadd.xlane.f32.xlu0 %v814
      %v816 = vpop.xlane.xlu0 %815
      %v817 = vsel %vm693, %v777, 0.0
      %818 = vadd.xlane.f32.xlu0 %v817
      %v819 = vpop.xlane.xlu0 %818
      %v820 = vsel %vm693, %v779, 0.0
      %821 = vadd.xlane.f32.xlu0 %v820
      %v822 = vpop.xlane.xlu0 %821
      %v823 = vsel %vm693, %v781, 0.0
      %824 = vadd.xlane.f32.xlu0 %v823
      %v825 = vpop.xlane.xlu0 %824
      %v826 = vsel %vm693, %v783, 0.0
      %827 = vadd.xlane.f32.xlu0 %v826
      %v828 = vpop.xlane.xlu0 %827
      %v829 = vsel %vm693, %v785, 0.0
      %830 = vadd.xlane.f32.xlu0 %v829
      %v831 = vpop.xlane.xlu0 %830
      %v832 = vsel %vm693, %v787, 0.0
      %833 = vadd.xlane.f32.xlu0 %v832
      %v834 = vpop.xlane.xlu0 %833
      %v835 = vsel %vm693, %v789, 0.0
      %836 = vadd.xlane.f32.xlu0 %v835
      %v837 = vpop.xlane.xlu0 %836
      %v838 = vrcp.pop %v792
      %v839 = vmul.f32 %v759, %v838
      %v840 = vrcp.pop %v795
      %v841 = vmul.f32 %v761, %v840
      %v842 = vrcp.pop %v798
      %v843 = vmul.f32 %v763, %v842
      %v844 = vrcp.pop %v801
      %v845 = vmul.f32 %v765, %v844
      %v846 = vrcp.pop %v804
      %v847 = vmul.f32 %v767, %v846
      %v848 = vrcp.pop %v807
      %v849 = vmul.f32 %v769, %v848
      %v850 = vrcp.pop %v810
      %v851 = vmul.f32 %v771, %v850
      %v852 = vrcp.pop %v813
      %v853 = vmul.f32 %v773, %v852
      %v854 = vrcp.pop %v816
      %v855 = vmul.f32 %v775, %v854
      %v856 = vrcp.pop %v819
      %v857 = vmul.f32 %v777, %v856
      %v858 = vrcp.pop %v822
      %v859 = vmul.f32 %v779, %v858
      %v860 = vrcp.pop %v825
      %v861 = vmul.f32 %v781, %v860
      %v862 = vrcp.pop %v828
      %v863 = vmul.f32 %v783, %v862
      %v864 = vrcp.pop %v831
      %v865 = vmul.f32 %v785, %v864
      %v866 = vrcp.pop %v834
      %v867 = vmul.f32 %v787, %v866
      %v868 = vrcp.pop %v837
      %v869 = vmul.f32 %v789, %v868
      %v870 = vpack.c.bf16 %v841, %v839
      %v871 = vpack.c.bf16 %v845, %v843
      %v872 = vpack.c.bf16 %v849, %v847
      %v873 = vpack.c.bf16 %v853, %v851
      %v874 = vpack.c.bf16 %v857, %v855
      %v875 = vpack.c.bf16 %v861, %v859
      %v876 = vpack.c.bf16 %v865, %v863
      %v877 = vpack.c.bf16 %v869, %v867
      %878 = vrot.lane.b32.xlu0 %v284, 64
      %v879 = vpop.permute.xlu0 %878
      %v882 = vsel %vm693, %v870, 0
      %884 = vmatprep.subr.bf16.mxu0 0
      %885 = vmatpush1.bf16.msra.mxu0 0
      %886 = vmatprep.subr.bf16.mxu0 0
      %887 = vmatpush1.bf16.msra.mxu0 0
      %888 = vmatprep.subr.bf16.mxu0 0
      %889 = vmatpush1.bf16.msra.mxu0 0
      %890 = vmatprep.subr.bf16.mxu0 0
      %891 = vmatpush1.bf16.msra.mxu0 0
      %892 = vmatprep.subr.bf16.mxu0 0
      %893 = vmatpush1.bf16.msra.mxu0 0
      %894 = vmatprep.subr.bf16.mxu0 0
      %895 = vmatpush1.bf16.msra.mxu0 0
      %896 = vmatprep.subr.bf16.mxu0 0
      %897 = vmatpush1.bf16.msra.mxu0 0
      %898 = vmatprep.subr.bf16.mxu0 0
      %899 = vmatpush1.bf16.msra.mxu0 %v879
      %900 = vmatprep.subr.bf16.mxu0 0
      %901 = vmatpush2.bf16.msra.mxu0 0
      %902 = vmatprep.subr.bf16.mxu0 0
      %903 = vmatpush2.bf16.msra.mxu0 0
      %904 = vmatprep.subr.bf16.mxu0 0
      %905 = vmatpush2.bf16.msra.mxu0 0
      %906 = vmatprep.subr.bf16.mxu0 0
      %907 = vmatpush2.bf16.msra.mxu0 0
      %908 = vmatprep.subr.bf16.mxu0 0
      %909 = vmatpush2.bf16.msra.mxu0 0
      %910 = vmatprep.subr.bf16.mxu0 0
      %911 = vmatpush2.bf16.msra.mxu0 0
      %912 = vmatprep.subr.bf16.mxu0 0
      %913 = vmatpush2.bf16.msra.mxu0 0
      %914 = vmatprep.subr.bf16.mxu0 0
      %915 = vmatpush2.bf16.msra.mxu0 0
      %916 = vmatprep.mubr.bf16.mxu0 0
      %917 = vmatmul.mubr.bf16.gmra.mxu0 %v882
      %v918 = vpop.f32.mrf.mxu0
      %v919 = vadd.f32 0.0, %v918
      %v920 = vpop.f32.mrf.mxu0
      %v921 = vpop.f32.mrf.mxu0
      %v922 = vadd.f32 0.0, %v921
      %v923 = vpop.f32.mrf.mxu0
      %924 = vdwg.mxu0
      %925 = vrot.lane.b32.xlu0 %v285, 64
      %v926 = vpop.permute.xlu0 %925
      %v929 = vsel %vm693, %v871, 0
      %931 = vmatprep.subr.bf16.mxu0 0
      %932 = vmatpush1.bf16.msra.mxu0 0
      %933 = vmatprep.subr.bf16.mxu0 0
      %934 = vmatpush1.bf16.msra.mxu0 0
      %935 = vmatprep.subr.bf16.mxu0 0
      %936 = vmatpush1.bf16.msra.mxu0 0
      %937 = vmatprep.subr.bf16.mxu0 0
      %938 = vmatpush1.bf16.msra.mxu0 0
      %939 = vmatprep.subr.bf16.mxu0 0
      %940 = vmatpush1.bf16.msra.mxu0 0
      %941 = vmatprep.subr.bf16.mxu0 0
      %942 = vmatpush1.bf16.msra.mxu0 0
      %943 = vmatprep.subr.bf16.mxu0 0
      %944 = vmatpush1.bf16.msra.mxu0 0
      %945 = vmatprep.subr.bf16.mxu0 0
      %946 = vmatpush1.bf16.msra.mxu0 %v926
      %947 = vmatprep.subr.bf16.mxu0 0
      %948 = vmatpush2.bf16.msra.mxu0 0
      %949 = vmatprep.subr.bf16.mxu0 0
      %950 = vmatpush2.bf16.msra.mxu0 0
      %951 = vmatprep.subr.bf16.mxu0 0
      %952 = vmatpush2.bf16.msra.mxu0 0
      %953 = vmatprep.subr.bf16.mxu0 0
      %954 = vmatpush2.bf16.msra.mxu0 0
      %955 = vmatprep.subr.bf16.mxu0 0
      %956 = vmatpush2.bf16.msra.mxu0 0
      %957 = vmatprep.subr.bf16.mxu0 0
      %958 = vmatpush2.bf16.msra.mxu0 0
      %959 = vmatprep.subr.bf16.mxu0 0
      %960 = vmatpush2.bf16.msra.mxu0 0
      %961 = vmatprep.subr.bf16.mxu0 0
      %962 = vmatpush2.bf16.msra.mxu0 0
      %963 = vmatprep.mubr.bf16.mxu0 0
      %964 = vmatmul.mubr.bf16.gmra.mxu0 %v929
      %v965 = vpop.f32.mrf.mxu0
      %v966 = vadd.f32 0.0, %v965
      %v967 = vpop.f32.mrf.mxu0
      %v968 = vpop.f32.mrf.mxu0
      %v969 = vadd.f32 0.0, %v968
      %v970 = vpop.f32.mrf.mxu0
      %971 = vdwg.mxu0
      %972 = vrot.lane.b32.xlu0 %v286, 64
      %v973 = vpop.permute.xlu0 %972
      %v976 = vsel %vm693, %v872, 0
      %978 = vmatprep.subr.bf16.mxu0 0
      %979 = vmatpush1.bf16.msra.mxu0 0
      %980 = vmatprep.subr.bf16.mxu0 0
      %981 = vmatpush1.bf16.msra.mxu0 0
      %982 = vmatprep.subr.bf16.mxu0 0
      %983 = vmatpush1.bf16.msra.mxu0 0
      %984 = vmatprep.subr.bf16.mxu0 0
      %985 = vmatpush1.bf16.msra.mxu0 0
      %986 = vmatprep.subr.bf16.mxu0 0
      %987 = vmatpush1.bf16.msra.mxu0 0
      %988 = vmatprep.subr.bf16.mxu0 0
      %989 = vmatpush1.bf16.msra.mxu0 0
      %990 = vmatprep.subr.bf16.mxu0 0
      %991 = vmatpush1.bf16.msra.mxu0 0
      %992 = vmatprep.subr.bf16.mxu0 0
      %993 = vmatpush1.bf16.msra.mxu0 %v973
      %994 = vmatprep.subr.bf16.mxu0 0
      %995 = vmatpush2.bf16.msra.mxu0 0
      %996 = vmatprep.subr.bf16.mxu0 0
      %997 = vmatpush2.bf16.msra.mxu0 0
      %998 = vmatprep.subr.bf16.mxu0 0
      %999 = vmatpush2.bf16.msra.mxu0 0
      %1000 = vmatprep.subr.bf16.mxu0 0
      %1001 = vmatpush2.bf16.msra.mxu0 0
      %1002 = vmatprep.subr.bf16.mxu0 0
      %1003 = vmatpush2.bf16.msra.mxu0 0
      %1004 = vmatprep.subr.bf16.mxu0 0
      %1005 = vmatpush2.bf16.msra.mxu0 0
      %1006 = vmatprep.subr.bf16.mxu0 0
      %1007 = vmatpush2.bf16.msra.mxu0 0
      %1008 = vmatprep.subr.bf16.mxu0 0
      %1009 = vmatpush2.bf16.msra.mxu0 0
      %1010 = vmatprep.mubr.bf16.mxu0 0
      %1011 = vmatmul.mubr.bf16.gmra.mxu0 %v976
      %v1012 = vpop.f32.mrf.mxu0
      %v1013 = vadd.f32 0.0, %v1012
      %v1014 = vpop.f32.mrf.mxu0
      %v1015 = vpop.f32.mrf.mxu0
      %v1016 = vadd.f32 0.0, %v1015
      %v1017 = vpop.f32.mrf.mxu0
      %1018 = vdwg.mxu0
      %1019 = vrot.lane.b32.xlu0 %v287, 64
      %v1020 = vpop.permute.xlu0 %1019
      %v1023 = vsel %vm693, %v873, 0
      %1025 = vmatprep.subr.bf16.mxu0 0
      %1026 = vmatpush1.bf16.msra.mxu0 0
      %1027 = vmatprep.subr.bf16.mxu0 0
      %1028 = vmatpush1.bf16.msra.mxu0 0
      %1029 = vmatprep.subr.bf16.mxu0 0
      %1030 = vmatpush1.bf16.msra.mxu0 0
      %1031 = vmatprep.subr.bf16.mxu0 0
      %1032 = vmatpush1.bf16.msra.mxu0 0
      %1033 = vmatprep.subr.bf16.mxu0 0
      %1034 = vmatpush1.bf16.msra.mxu0 0
      %1035 = vmatprep.subr.bf16.mxu0 0
      %1036 = vmatpush1.bf16.msra.mxu0 0
      %1037 = vmatprep.subr.bf16.mxu0 0
      %1038 = vmatpush1.bf16.msra.mxu0 0
      %1039 = vmatprep.subr.bf16.mxu0 0
      %1040 = vmatpush1.bf16.msra.mxu0 %v1020
      %1041 = vmatprep.subr.bf16.mxu0 0
      %1042 = vmatpush2.bf16.msra.mxu0 0
      %1043 = vmatprep.subr.bf16.mxu0 0
      %1044 = vmatpush2.bf16.msra.mxu0 0
      %1045 = vmatprep.subr.bf16.mxu0 0
      %1046 = vmatpush2.bf16.msra.mxu0 0
      %1047 = vmatprep.subr.bf16.mxu0 0
      %1048 = vmatpush2.bf16.msra.mxu0 0
      %1049 = vmatprep.subr.bf16.mxu0 0
      %1050 = vmatpush2.bf16.msra.mxu0 0
      %1051 = vmatprep.subr.bf16.mxu0 0
      %1052 = vmatpush2.bf16.msra.mxu0 0
      %1053 = vmatprep.subr.bf16.mxu0 0
      %1054 = vmatpush2.bf16.msra.mxu0 0
      %1055 = vmatprep.subr.bf16.mxu0 0
      %1056 = vmatpush2.bf16.msra.mxu0 0
      %1057 = vmatprep.mubr.bf16.mxu0 0
      %1058 = vmatmul.mubr.bf16.gmra.mxu0 %v1023
      %v1059 = vpop.f32.mrf.mxu0
      %v1060 = vadd.f32 0.0, %v1059
      %v1061 = vpop.f32.mrf.mxu0
      %v1062 = vpop.f32.mrf.mxu0
      %v1063 = vadd.f32 0.0, %v1062
      %v1064 = vpop.f32.mrf.mxu0
      %1065 = vdwg.mxu0
      %1066 = vrot.lane.b32.xlu0 %v288, 64
      %v1067 = vpop.permute.xlu0 %1066
      %v1070 = vsel %vm693, %v874, 0
      %1072 = vmatprep.subr.bf16.mxu0 0
      %1073 = vmatpush1.bf16.msra.mxu0 0
      %1074 = vmatprep.subr.bf16.mxu0 0
      %1075 = vmatpush1.bf16.msra.mxu0 0
      %1076 = vmatprep.subr.bf16.mxu0 0
      %1077 = vmatpush1.bf16.msra.mxu0 0
      %1078 = vmatprep.subr.bf16.mxu0 0
      %1079 = vmatpush1.bf16.msra.mxu0 0
      %1080 = vmatprep.subr.bf16.mxu0 0
      %1081 = vmatpush1.bf16.msra.mxu0 0
      %1082 = vmatprep.subr.bf16.mxu0 0
      %1083 = vmatpush1.bf16.msra.mxu0 0
      %1084 = vmatprep.subr.bf16.mxu0 0
      %1085 = vmatpush1.bf16.msra.mxu0 0
      %1086 = vmatprep.subr.bf16.mxu0 0
      %1087 = vmatpush1.bf16.msra.mxu0 %v1067
      %1088 = vmatprep.subr.bf16.mxu0 0
      %1089 = vmatpush2.bf16.msra.mxu0 0
      %1090 = vmatprep.subr.bf16.mxu0 0
      %1091 = vmatpush2.bf16.msra.mxu0 0
      %1092 = vmatprep.subr.bf16.mxu0 0
      %1093 = vmatpush2.bf16.msra.mxu0 0
      %1094 = vmatprep.subr.bf16.mxu0 0
      %1095 = vmatpush2.bf16.msra.mxu0 0
      %1096 = vmatprep.subr.bf16.mxu0 0
      %1097 = vmatpush2.bf16.msra.mxu0 0
      %1098 = vmatprep.subr.bf16.mxu0 0
      %1099 = vmatpush2.bf16.msra.mxu0 0
      %1100 = vmatprep.subr.bf16.mxu0 0
      %1101 = vmatpush2.bf16.msra.mxu0 0
      %1102 = vmatprep.subr.bf16.mxu0 0
      %1103 = vmatpush2.bf16.msra.mxu0 0
      %1104 = vmatprep.mubr.bf16.mxu0 0
      %1105 = vmatmul.mubr.bf16.gmra.mxu0 %v1070
      %v1106 = vpop.f32.mrf.mxu0
      %v1107 = vadd.f32 0.0, %v1106
      %v1108 = vpop.f32.mrf.mxu0
      %v1109 = vpop.f32.mrf.mxu0
      %v1110 = vadd.f32 0.0, %v1109
      %v1111 = vpop.f32.mrf.mxu0
      %1112 = vdwg.mxu0
      %1113 = vrot.lane.b32.xlu0 %v289, 64
      %v1114 = vpop.permute.xlu0 %1113
      %v1117 = vsel %vm693, %v875, 0
      %1119 = vmatprep.subr.bf16.mxu0 0
      %1120 = vmatpush1.bf16.msra.mxu0 0
      %1121 = vmatprep.subr.bf16.mxu0 0
      %1122 = vmatpush1.bf16.msra.mxu0 0
      %1123 = vmatprep.subr.bf16.mxu0 0
      %1124 = vmatpush1.bf16.msra.mxu0 0
      %1125 = vmatprep.subr.bf16.mxu0 0
      %1126 = vmatpush1.bf16.msra.mxu0 0
      %1127 = vmatprep.subr.bf16.mxu0 0
      %1128 = vmatpush1.bf16.msra.mxu0 0
      %1129 = vmatprep.subr.bf16.mxu0 0
      %1130 = vmatpush1.bf16.msra.mxu0 0
      %1131 = vmatprep.subr.bf16.mxu0 0
      %1132 = vmatpush1.bf16.msra.mxu0 0
      %1133 = vmatprep.subr.bf16.mxu0 0
      %1134 = vmatpush1.bf16.msra.mxu0 %v1114
      %1135 = vmatprep.subr.bf16.mxu0 0
      %1136 = vmatpush2.bf16.msra.mxu0 0
      %1137 = vmatprep.subr.bf16.mxu0 0
      %1138 = vmatpush2.bf16.msra.mxu0 0
      %1139 = vmatprep.subr.bf16.mxu0 0
      %1140 = vmatpush2.bf16.msra.mxu0 0
      %1141 = vmatprep.subr.bf16.mxu0 0
      %1142 = vmatpush2.bf16.msra.mxu0 0
      %1143 = vmatprep.subr.bf16.mxu0 0
      %1144 = vmatpush2.bf16.msra.mxu0 0
      %1145 = vmatprep.subr.bf16.mxu0 0
      %1146 = vmatpush2.bf16.msra.mxu0 0
      %1147 = vmatprep.subr.bf16.mxu0 0
      %1148 = vmatpush2.bf16.msra.mxu0 0
      %1149 = vmatprep.subr.bf16.mxu0 0
      %1150 = vmatpush2.bf16.msra.mxu0 0
      %1151 = vmatprep.mubr.bf16.mxu0 0
      %1152 = vmatmul.mubr.bf16.gmra.mxu0 %v1117
      %v1153 = vpop.f32.mrf.mxu0
      %v1154 = vadd.f32 0.0, %v1153
      %v1155 = vpop.f32.mrf.mxu0
      %v1156 = vpop.f32.mrf.mxu0
      %v1157 = vadd.f32 0.0, %v1156
      %v1158 = vpop.f32.mrf.mxu0
      %1159 = vdwg.mxu0
      %1160 = vrot.lane.b32.xlu0 %v290, 64
      %v1161 = vpop.permute.xlu0 %1160
      %v1164 = vsel %vm693, %v876, 0
      %1166 = vmatprep.subr.bf16.mxu0 0
      %1167 = vmatpush1.bf16.msra.mxu0 0
      %1168 = vmatprep.subr.bf16.mxu0 0
      %1169 = vmatpush1.bf16.msra.mxu0 0
      %1170 = vmatprep.subr.bf16.mxu0 0
      %1171 = vmatpush1.bf16.msra.mxu0 0
      %1172 = vmatprep.subr.bf16.mxu0 0
      %1173 = vmatpush1.bf16.msra.mxu0 0
      %1174 = vmatprep.subr.bf16.mxu0 0
      %1175 = vmatpush1.bf16.msra.mxu0 0
      %1176 = vmatprep.subr.bf16.mxu0 0
      %1177 = vmatpush1.bf16.msra.mxu0 0
      %1178 = vmatprep.subr.bf16.mxu0 0
      %1179 = vmatpush1.bf16.msra.mxu0 0
      %1180 = vmatprep.subr.bf16.mxu0 0
      %1181 = vmatpush1.bf16.msra.mxu0 %v1161
      %1182 = vmatprep.subr.bf16.mxu0 0
      %1183 = vmatpush2.bf16.msra.mxu0 0
      %1184 = vmatprep.subr.bf16.mxu0 0
      %1185 = vmatpush2.bf16.msra.mxu0 0
      %1186 = vmatprep.subr.bf16.mxu0 0
      %1187 = vmatpush2.bf16.msra.mxu0 0
      %1188 = vmatprep.subr.bf16.mxu0 0
      %1189 = vmatpush2.bf16.msra.mxu0 0
      %1190 = vmatprep.subr.bf16.mxu0 0
      %1191 = vmatpush2.bf16.msra.mxu0 0
      %1192 = vmatprep.subr.bf16.mxu0 0
      %1193 = vmatpush2.bf16.msra.mxu0 0
      %1194 = vmatprep.subr.bf16.mxu0 0
      %1195 = vmatpush2.bf16.msra.mxu0 0
      %1196 = vmatprep.subr.bf16.mxu0 0
      %1197 = vmatpush2.bf16.msra.mxu0 0
      %1198 = vmatprep.mubr.bf16.mxu0 0
      %1199 = vmatmul.mubr.bf16.gmra.mxu0 %v1164
      %v1200 = vpop.f32.mrf.mxu0
      %v1201 = vadd.f32 0.0, %v1200
      %v1202 = vpop.f32.mrf.mxu0
      %v1203 = vpop.f32.mrf.mxu0
      %v1204 = vadd.f32 0.0, %v1203
      %v1205 = vpop.f32.mrf.mxu0
      %1206 = vdwg.mxu0
      %1207 = vrot.lane.b32.xlu0 %v291, 64
      %v1208 = vpop.permute.xlu0 %1207
      %v1211 = vsel %vm693, %v877, 0
      %1213 = vmatprep.subr.bf16.mxu0 0
      %1214 = vmatpush1.bf16.msra.mxu0 0
      %1215 = vmatprep.subr.bf16.mxu0 0
      %1216 = vmatpush1.bf16.msra.mxu0 0
      %1217 = vmatprep.subr.bf16.mxu0 0
      %1218 = vmatpush1.bf16.msra.mxu0 0
      %1219 = vmatprep.subr.bf16.mxu0 0
      %1220 = vmatpush1.bf16.msra.mxu0 0
      %1221 = vmatprep.subr.bf16.mxu0 0
      %1222 = vmatpush1.bf16.msra.mxu0 0
      %1223 = vmatprep.subr.bf16.mxu0 0
      %1224 = vmatpush1.bf16.msra.mxu0 0
      %1225 = vmatprep.subr.bf16.mxu0 0
      %1226 = vmatpush1.bf16.msra.mxu0 0
      %1227 = vmatprep.subr.bf16.mxu0 0
      %1228 = vmatpush1.bf16.msra.mxu0 %v1208
      %1229 = vmatprep.subr.bf16.mxu0 0
      %1230 = vmatpush2.bf16.msra.mxu0 0
      %1231 = vmatprep.subr.bf16.mxu0 0
      %1232 = vmatpush2.bf16.msra.mxu0 0
      %1233 = vmatprep.subr.bf16.mxu0 0
      %1234 = vmatpush2.bf16.msra.mxu0 0
      %1235 = vmatprep.subr.bf16.mxu0 0
      %1236 = vmatpush2.bf16.msra.mxu0 0
      %1237 = vmatprep.subr.bf16.mxu0 0
      %1238 = vmatpush2.bf16.msra.mxu0 0
      %1239 = vmatprep.subr.bf16.mxu0 0
      %1240 = vmatpush2.bf16.msra.mxu0 0
      %1241 = vmatprep.subr.bf16.mxu0 0
      %1242 = vmatpush2.bf16.msra.mxu0 0
      %1243 = vmatprep.subr.bf16.mxu0 0
      %1244 = vmatpush2.bf16.msra.mxu0 0
      %1245 = vmatprep.mubr.bf16.mxu0 0
      %1246 = vmatmul.mubr.bf16.gmra.mxu0 %v1211
      %v1247 = vpop.f32.mrf.mxu0
      %v1248 = vadd.f32 0.0, %v1247
      %v1249 = vpop.f32.mrf.mxu0
      %v1250 = vpop.f32.mrf.mxu0
      %v1251 = vadd.f32 0.0, %v1250
      %v1252 = vpop.f32.mrf.mxu0
      %1253 = vdwg.mxu0
      %1258 = vrot.lane.b32.xlu0 %v1013, 8
      %v1259 = vpop.permute.xlu0 %1258
      %1260 = vrot.lane.b32.xlu0 %v1016, 8
      %v1261 = vpop.permute.xlu0 %1260
      %1262 = vrot.lane.b32.xlu0 %v1060, 8
      %v1263 = vpop.permute.xlu0 %1262
      %1264 = vrot.lane.b32.xlu0 %v1063, 8
      %v1265 = vpop.permute.xlu0 %1264
      %1274 = vrot.lane.b32.xlu0 %v1107, 16
      %v1275 = vpop.permute.xlu0 %1274
      %1276 = vrot.lane.b32.xlu0 %v1110, 16
      %v1277 = vpop.permute.xlu0 %1276
      %1278 = vrot.lane.b32.xlu0 %v1154, 16
      %v1279 = vpop.permute.xlu0 %1278
      %1280 = vrot.lane.b32.xlu0 %v1157, 16
      %v1281 = vpop.permute.xlu0 %1280
      %1290 = vrot.lane.b32.xlu0 %v1201, 24
      %v1291 = vpop.permute.xlu0 %1290
      %1292 = vrot.lane.b32.xlu0 %v1204, 24
      %v1293 = vpop.permute.xlu0 %1292
      %1294 = vrot.lane.b32.xlu0 %v1248, 24
      %v1295 = vpop.permute.xlu0 %1294
      %1296 = vrot.lane.b32.xlu0 %v1251, 24
      %v1297 = vpop.permute.xlu0 %1296
      %v1302 = vsel %vm295, %v919, %v1259
      %v1303 = vsel %vm295, %v922, %v1261
      %v1304 = vsel %vm295, %v966, %v1263
      %v1305 = vsel %vm295, %v969, %v1265
      %v1306 = vsel %vm693, %v1302, %v1275
      %v1307 = vsel %vm693, %v1303, %v1277
      %v1308 = vsel %vm693, %v1304, %v1279
      %v1309 = vsel %vm693, %v1305, %v1281
      %vm1310 = vcmask 195584
      %v1311 = vsel %vm1310, %v1306, %v1291
      %v1312 = vsel %vm1310, %v1307, %v1293
      %v1313 = vsel %vm1310, %v1308, %v1295
      %v1314 = vsel %vm1310, %v1309, %v1297
      %v1315 = vpack.c.bf16 %v1312, %v1311
      %v1316 = vpack.c.bf16 %v1314, %v1313
      %s1317 = smul.u32 %s150, 8
      %s1318 = scalar_lea.vmem %s9, %s1317
      %v1319 = vld [vmem:[%s1318] sm:$0x3f]
      %s1320 = smul.addr %s161, 4
      %s1321 = scalar_lea.vmem %s5, %s1320
      %v1322 = vld [vmem:[%s1321] sm:$0xf]
      %v1323 = vld [vmem:[%s1321 + $0x4] sm:$0xf]
      %v1324 = vld [vmem:[%s1321 + $0x8] sm:$0xf]
      %v1325 = vld [vmem:[%s1321 + $0xc] sm:$0xf]
      %v1326 = vlaneseq
      %v1327 = vshrl.u32 %v1326, 7
      %v1328 = vsub.s32 0, %v1327
      %v1329 = vrot.slane %v1319, %v1328
      %v1334 = vunpack.c.l.b16 %v1322
      %v1335 = vunpack.c.l.b16 %v1323
      %v1336 = vunpack.c.l.b16 %v1324
      %v1337 = vunpack.c.l.b16 %v1325
      %v1338 = vpack.c.b16 %v1335, %v1334
      %v1339 = vpack.c.b16 %v1337, %v1336
      %v1343 = vsel %vm188, %v1315, 0
      %v1346 = vsel %vm188, %v1316, 0
      %1348 = vmatprep.subr.bf16.mxu0 0
      %1349 = vmatpush1.bf16.msra.mxu0 0
      %1350 = vmatprep.subr.bf16.mxu0 0
      %1351 = vmatpush1.bf16.msra.mxu0 0
      %1352 = vmatprep.subr.bf16.mxu0 0
      %1353 = vmatpush1.bf16.msra.mxu0 0
      %1354 = vmatprep.subr.bf16.mxu0 0
      %1355 = vmatpush1.bf16.msra.mxu0 0
      %1356 = vmatprep.subr.bf16.mxu0 0
      %1357 = vmatpush1.bf16.msra.mxu0 0
      %1358 = vmatprep.subr.bf16.mxu0 0
      %1359 = vmatpush1.bf16.msra.mxu0 0
      %1360 = vmatprep.subr.bf16.mxu0 0
      %1361 = vmatpush1.bf16.msra.mxu0 %v1339
      %1362 = vmatprep.subr.bf16.mxu0 0
      %1363 = vmatpush1.bf16.msra.mxu0 %v1338
      %1364 = vmatprep.subr.bf16.mxu0 0
      %1365 = vmatpush2.bf16.msra.mxu0 0
      %1366 = vmatprep.subr.bf16.mxu0 0
      %1367 = vmatpush2.bf16.msra.mxu0 0
      %1368 = vmatprep.subr.bf16.mxu0 0
      %1369 = vmatpush2.bf16.msra.mxu0 0
      %1370 = vmatprep.subr.bf16.mxu0 0
      %1371 = vmatpush2.bf16.msra.mxu0 0
      %1372 = vmatprep.subr.bf16.mxu0 0
      %1373 = vmatpush2.bf16.msra.mxu0 0
      %1374 = vmatprep.subr.bf16.mxu0 0
      %1375 = vmatpush2.bf16.msra.mxu0 0
      %1376 = vmatprep.subr.bf16.mxu0 0
      %1377 = vmatpush2.bf16.msra.mxu0 0
      %1378 = vmatprep.subr.bf16.mxu0 0
      %1379 = vmatpush2.bf16.msra.mxu0 0
      %1380 = vmatprep.mubr.bf16.mxu0 0
      %1381 = vmatmul.mubr.bf16.gmra.mxu0 %v1343
      %v1382 = vpop.f32.mrf.mxu0
      %v1383 = vadd.f32 %v1329, %v1382
      %v1384 = vpop.f32.mrf.mxu0
      %v1385 = vpop.f32.mrf.mxu0
      %v1386 = vadd.f32 %v1329, %v1385
      %v1387 = vpop.f32.mrf.mxu0
      %1388 = vmatprep.mubr.bf16.mxu0 0
      %1389 = vmatmul.mubr.bf16.gmra.mxu0 %v1346
      %v1390 = vpop.f32.mrf.mxu0
      %v1391 = vadd.f32 %v1329, %v1390
      %v1392 = vpop.f32.mrf.mxu0
      %v1393 = vpop.f32.mrf.mxu0
      %v1394 = vadd.f32 %v1329, %v1393
      %v1395 = vpop.f32.mrf.mxu0
      %1396 = vdwg.mxu0
      %v1397 = vadd.f32 %v155, %v1383
      %v1398 = vadd.f32 %v156, %v1386
      %v1399 = vadd.f32 %v157, %v1391
      %v1400 = vadd.f32 %v158, %v1394
      %v1401 = vsel %vm188, %v1397, 0.0
      %1402 = vadd.xlane.f32.xlu0 %v1401
      %v1403 = vpop.xlane.xlu0 %1402
      %v1404 = vsel %vm188, %v1398, 0.0
      %1405 = vadd.xlane.f32.xlu0 %v1404
      %v1406 = vpop.xlane.xlu0 %1405
      %v1407 = vsel %vm188, %v1399, 0.0
      %1408 = vadd.xlane.f32.xlu0 %v1407
      %v1409 = vpop.xlane.xlu0 %1408
      %v1410 = vsel %vm188, %v1400, 0.0
      %1411 = vadd.xlane.f32.xlu0 %v1410
      %v1412 = vpop.xlane.xlu0 %1411
      %v1413 = vrcp.pop 32.0
      %v1414 = vmul.f32 %v1403, %v1413
      %v1415 = vmul.f32 %v1406, %v1413
      %v1416 = vmul.f32 %v1409, %v1413
      %v1417 = vmul.f32 %v1412, %v1413
      %v1418 = vsub.f32 %v1397, %v1414
      %v1419 = vsub.f32 %v1398, %v1415
      %v1420 = vsub.f32 %v1399, %v1416
      %v1421 = vsub.f32 %v1400, %v1417
      %v1422 = vmul.f32 %v1418, %v1418
      %v1423 = vmul.f32 %v1419, %v1419
      %v1424 = vmul.f32 %v1420, %v1420
      %v1425 = vmul.f32 %v1421, %v1421
      %v1426 = vsel %vm188, %v1422, 0.0
      %1427 = vadd.xlane.f32.xlu0 %v1426
      %v1428 = vpop.xlane.xlu0 %1427
      %v1429 = vsel %vm188, %v1423, 0.0
      %1430 = vadd.xlane.f32.xlu0 %v1429
      %v1431 = vpop.xlane.xlu0 %1430
      %v1432 = vsel %vm188, %v1424, 0.0
      %1433 = vadd.xlane.f32.xlu0 %v1432
      %v1434 = vpop.xlane.xlu0 %1433
      %v1435 = vsel %vm188, %v1425, 0.0
      %1436 = vadd.xlane.f32.xlu0 %v1435
      %v1437 = vpop.xlane.xlu0 %1436
      %v1438 = vmul.f32 %v1428, %v1413
      %v1439 = vmul.f32 %v1431, %v1413
      %v1440 = vmul.f32 %v1434, %v1413
      %v1441 = vmul.f32 %v1437, %v1413
      %v1442 = vadd.f32 %v1438, 1e-05
      %v1443 = vadd.f32 %v1439, 1e-05
      %v1444 = vadd.f32 %v1440, 1e-05
      %v1445 = vadd.f32 %v1441, 1e-05
      %v1446 = vrsqrt.pop %v1442
      %v1447 = vrsqrt.pop %v1443
      %v1448 = vrsqrt.pop %v1444
      %v1449 = vrsqrt.pop %v1445
      %v1450 = vmul.f32 %v1418, %v1446
      %v1451 = vmul.f32 %v1419, %v1447
      %v1452 = vmul.f32 %v1420, %v1448
      %v1453 = vmul.f32 %v1421, %v1449
      %v1454 = vlaneseq
      %v1455 = vshrl.u32 %v1454, 7
      %v1456 = vsub.s32 1, %v1455
      %v1457 = vrot.slane %v1319, %v1456
      %v1458 = vmul.f32 %v1450, %v1457
      %v1459 = vmul.f32 %v1451, %v1457
      %v1460 = vmul.f32 %v1452, %v1457
      %v1461 = vmul.f32 %v1453, %v1457
      %v1462 = vlaneseq
      %v1463 = vshrl.u32 %v1462, 7
      %v1464 = vsub.s32 2, %v1463
      %v1465 = vrot.slane %v1319, %v1464
      %v1466 = vadd.f32 %v1458, %v1465
      %v1467 = vadd.f32 %v1459, %v1465
      %v1468 = vadd.f32 %v1460, %v1465
      %v1469 = vadd.f32 %v1461, %v1465
      %v1470 = vpack.c.bf16 %v1467, %v1466
      %v1471 = vpack.c.bf16 %v1469, %v1468
      %s1472 = smul.addr %s161, 4
      %s1473 = scalar_lea.vmem [#allocation2], %s1472
      %v1474 = vld [vmem:[%s1473] sm:$0xf]
      %v1475 = vld [vmem:[%s1473 + $0x4] sm:$0xf]
      %v1476 = vld [vmem:[%s1473 + $0x8] sm:$0xf]
      %v1477 = vld [vmem:[%s1473 + $0xc] sm:$0xf]
      %s1478 = scalar_lea.vmem %s7, %s150
      %v1479 = vld [vmem:[%s1478] sm:$0x1]
      %v1481 = vlaneseq
      %v1482 = vshrl.u32 %v1481, 7
      %v1483 = vsub.s32 0, %v1482
      %v1484 = vrot.slane %v1479, %v1483
      %v1490 = vunpack.c.l.b16 %v1474
      %v1491 = vunpack.c.l.b16 %v1475
      %v1492 = vunpack.c.l.b16 %v1476
      %v1493 = vunpack.c.l.b16 %v1477
      %v1494 = vpack.c.b16 %v1491, %v1490
      %v1495 = vpack.c.b16 %v1493, %v1492
      %v1499 = vsel %vm188, %v1470, 0
      %v1502 = vsel %vm188, %v1471, 0
      %1504 = vmatprep.subr.bf16.mxu0 0
      %1505 = vmatpush1.bf16.msra.mxu0 0
      %1506 = vmatprep.subr.bf16.mxu0 0
      %1507 = vmatpush1.bf16.msra.mxu0 0
      %1508 = vmatprep.subr.bf16.mxu0 0
      %1509 = vmatpush1.bf16.msra.mxu0 0
      %1510 = vmatprep.subr.bf16.mxu0 0
      %1511 = vmatpush1.bf16.msra.mxu0 0
      %1512 = vmatprep.subr.bf16.mxu0 0
      %1513 = vmatpush1.bf16.msra.mxu0 0
      %1514 = vmatprep.subr.bf16.mxu0 0
      %1515 = vmatpush1.bf16.msra.mxu0 0
      %1516 = vmatprep.subr.bf16.mxu0 0
      %1517 = vmatpush1.bf16.msra.mxu0 %v1495
      %1518 = vmatprep.subr.bf16.mxu0 0
      %1519 = vmatpush1.bf16.msra.mxu0 %v1494
      %1520 = vmatprep.subr.bf16.mxu0 0
      %1521 = vmatpush2.bf16.msra.mxu0 0
      %1522 = vmatprep.subr.bf16.mxu0 0
      %1523 = vmatpush2.bf16.msra.mxu0 0
      %1524 = vmatprep.subr.bf16.mxu0 0
      %1525 = vmatpush2.bf16.msra.mxu0 0
      %1526 = vmatprep.subr.bf16.mxu0 0
      %1527 = vmatpush2.bf16.msra.mxu0 0
      %1528 = vmatprep.subr.bf16.mxu0 0
      %1529 = vmatpush2.bf16.msra.mxu0 0
      %1530 = vmatprep.subr.bf16.mxu0 0
      %1531 = vmatpush2.bf16.msra.mxu0 0
      %1532 = vmatprep.subr.bf16.mxu0 0
      %1533 = vmatpush2.bf16.msra.mxu0 0
      %1534 = vmatprep.subr.bf16.mxu0 0
      %1535 = vmatpush2.bf16.msra.mxu0 0
      %1536 = vmatprep.mubr.bf16.mxu0 0
      %1537 = vmatmul.mubr.bf16.gmra.mxu0 %v1499
      %v1538 = vpop.f32.mrf.mxu0
      %v1539 = vadd.f32 %v1484, %v1538
      %v1540 = vpop.f32.mrf.mxu0
      %v1541 = vpop.f32.mrf.mxu0
      %v1542 = vadd.f32 %v1484, %v1541
      %v1543 = vpop.f32.mrf.mxu0
      %1544 = vmatprep.mubr.bf16.mxu0 0
      %1545 = vmatmul.mubr.bf16.gmra.mxu0 %v1502
      %v1546 = vpop.f32.mrf.mxu0
      %v1547 = vadd.f32 %v1484, %v1546
      %v1548 = vpop.f32.mrf.mxu0
      %v1549 = vpop.f32.mrf.mxu0
      %v1550 = vadd.f32 %v1484, %v1549
      %v1551 = vpop.f32.mrf.mxu0
      %1552 = vdwg.mxu0
      %v1553 = vmax.f32 %v1539, 0.0
      %v1554 = vmax.f32 %v1542, 0.0
      %v1555 = vmax.f32 %v1547, 0.0
      %v1556 = vmax.f32 %v1550, 0.0
      %v1557 = vpack.c.bf16 %v1554, %v1553
      %v1558 = vpack.c.bf16 %v1556, %v1555
      %s1559 = smul.addr %s1317, 4
      %s1560 = scalar_lea.vmem %s8, %s1559
      %v1561 = vld [vmem:[%s1560] sm:$0xf]
      %v1562 = vld [vmem:[%s1560 + $0x4] sm:$0xf]
      %v1563 = vld [vmem:[%s1560 + $0x8] sm:$0xf]
      %v1564 = vld [vmem:[%s1560 + $0xc] sm:$0xf]
      %v1565 = vld [vmem:[%s1560 + $0x10] sm:$0xf]
      %v1566 = vld [vmem:[%s1560 + $0x14] sm:$0xf]
      %v1567 = vld [vmem:[%s1560 + $0x18] sm:$0xf]
      %v1568 = vld [vmem:[%s1560 + $0x1c] sm:$0xf]
      %v1569 = vlaneseq
      %v1570 = vshrl.u32 %v1569, 7
      %v1571 = vsub.s32 5, %v1570
      %v1572 = vrot.slane %v1319, %v1571
      %v1581 = vunpack.c.l.b16 %v1561
      %v1582 = vunpack.c.l.b16 %v1562
      %v1583 = vunpack.c.l.b16 %v1563
      %v1584 = vunpack.c.l.b16 %v1564
      %v1585 = vunpack.c.l.b16 %v1565
      %v1586 = vunpack.c.l.b16 %v1566
      %v1587 = vunpack.c.l.b16 %v1567
      %v1588 = vunpack.c.l.b16 %v1568
      %v1589 = vpack.c.b16 %v1582, %v1581
      %v1590 = vpack.c.b16 %v1584, %v1583
      %v1591 = vpack.c.b16 %v1586, %v1585
      %v1592 = vpack.c.b16 %v1588, %v1587
      %v1598 = vsel %vm93, %v1557, 0
      %v1601 = vsel %vm93, %v1558, 0
      %1603 = vmatprep.subr.bf16.mxu0 0
      %1604 = vmatpush1.bf16.msra.mxu0 0
      %1605 = vmatprep.subr.bf16.mxu0 0
      %1606 = vmatpush1.bf16.msra.mxu0 0
      %1607 = vmatprep.subr.bf16.mxu0 0
      %1608 = vmatpush1.bf16.msra.mxu0 0
      %1609 = vmatprep.subr.bf16.mxu0 0
      %1610 = vmatpush1.bf16.msra.mxu0 0
      %1611 = vmatprep.subr.bf16.mxu0 0
      %1612 = vmatpush1.bf16.msra.mxu0 %v1592
      %1613 = vmatprep.subr.bf16.mxu0 0
      %1614 = vmatpush1.bf16.msra.mxu0 %v1591
      %1615 = vmatprep.subr.bf16.mxu0 0
      %1616 = vmatpush1.bf16.msra.mxu0 %v1590
      %1617 = vmatprep.subr.bf16.mxu0 0
      %1618 = vmatpush1.bf16.msra.mxu0 %v1589
      %1619 = vmatprep.subr.bf16.mxu0 0
      %1620 = vmatpush2.bf16.msra.mxu0 0
      %1621 = vmatprep.subr.bf16.mxu0 0
      %1622 = vmatpush2.bf16.msra.mxu0 0
      %1623 = vmatprep.subr.bf16.mxu0 0
      %1624 = vmatpush2.bf16.msra.mxu0 0
      %1625 = vmatprep.subr.bf16.mxu0 0
      %1626 = vmatpush2.bf16.msra.mxu0 0
      %1627 = vmatprep.subr.bf16.mxu0 0
      %1628 = vmatpush2.bf16.msra.mxu0 0
      %1629 = vmatprep.subr.bf16.mxu0 0
      %1630 = vmatpush2.bf16.msra.mxu0 0
      %1631 = vmatprep.subr.bf16.mxu0 0
      %1632 = vmatpush2.bf16.msra.mxu0 0
      %1633 = vmatprep.subr.bf16.mxu0 0
      %1634 = vmatpush2.bf16.msra.mxu0 0
      %1635 = vmatprep.mubr.bf16.mxu0 0
      %1636 = vmatmul.mubr.bf16.gmra.mxu0 %v1598
      %v1637 = vpop.f32.mrf.mxu0
      %v1638 = vadd.f32 %v1572, %v1637
      %v1639 = vpop.f32.mrf.mxu0
      %v1640 = vpop.f32.mrf.mxu0
      %v1641 = vadd.f32 %v1572, %v1640
      %v1642 = vpop.f32.mrf.mxu0
      %1643 = vmatprep.mubr.bf16.mxu0 0
      %1644 = vmatmul.mubr.bf16.gmra.mxu0 %v1601
      %v1645 = vpop.f32.mrf.mxu0
      %v1646 = vadd.f32 %v1572, %v1645
      %v1647 = vpop.f32.mrf.mxu0
      %v1648 = vpop.f32.mrf.mxu0
      %v1649 = vadd.f32 %v1572, %v1648
      %v1650 = vpop.f32.mrf.mxu0
      %1651 = vdwg.mxu0
      %v1652 = vadd.f32 %v1466, %v1638
      %v1653 = vadd.f32 %v1467, %v1641
      %v1654 = vadd.f32 %v1468, %v1646
      %v1655 = vadd.f32 %v1469, %v1649
      %v1656 = vsel %vm188, %v1652, 0.0
      %1657 = vadd.xlane.f32.xlu0 %v1656
      %v1658 = vpop.xlane.xlu0 %1657
      %v1659 = vsel %vm188, %v1653, 0.0
      %1660 = vadd.xlane.f32.xlu0 %v1659
      %v1661 = vpop.xlane.xlu0 %1660
      %v1662 = vsel %vm188, %v1654, 0.0
      %1663 = vadd.xlane.f32.xlu0 %v1662
      %v1664 = vpop.xlane.xlu0 %1663
      %v1665 = vsel %vm188, %v1655, 0.0
      %1666 = vadd.xlane.f32.xlu0 %v1665
      %v1667 = vpop.xlane.xlu0 %1666
      %v1668 = vmul.f32 %v1658, %v1413
      %v1669 = vmul.f32 %v1661, %v1413
      %v1670 = vmul.f32 %v1664, %v1413
      %v1671 = vmul.f32 %v1667, %v1413
      %v1672 = vsub.f32 %v1652, %v1668
      %v1673 = vsub.f32 %v1653, %v1669
      %v1674 = vsub.f32 %v1654, %v1670
      %v1675 = vsub.f32 %v1655, %v1671
      %v1676 = vmul.f32 %v1672, %v1672
      %v1677 = vmul.f32 %v1673, %v1673
      %v1678 = vmul.f32 %v1674, %v1674
      %v1679 = vmul.f32 %v1675, %v1675
      %v1680 = vsel %vm188, %v1676, 0.0
      %1681 = vadd.xlane.f32.xlu0 %v1680
      %v1682 = vpop.xlane.xlu0 %1681
      %v1683 = vsel %vm188, %v1677, 0.0
      %1684 = vadd.xlane.f32.xlu0 %v1683
      %v1685 = vpop.xlane.xlu0 %1684
      %v1686 = vsel %vm188, %v1678, 0.0
      %1687 = vadd.xlane.f32.xlu0 %v1686
      %v1688 = vpop.xlane.xlu0 %1687
      %v1689 = vsel %vm188, %v1679, 0.0
      %1690 = vadd.xlane.f32.xlu0 %v1689
      %v1691 = vpop.xlane.xlu0 %1690
      %v1692 = vmul.f32 %v1682, %v1413
      %v1693 = vmul.f32 %v1685, %v1413
      %v1694 = vmul.f32 %v1688, %v1413
      %v1695 = vmul.f32 %v1691, %v1413
      %v1696 = vadd.f32 %v1692, 1e-05
      %v1697 = vadd.f32 %v1693, 1e-05
      %v1698 = vadd.f32 %v1694, 1e-05
      %v1699 = vadd.f32 %v1695, 1e-05
      %v1700 = vrsqrt.pop %v1696
      %v1701 = vrsqrt.pop %v1697
      %v1702 = vrsqrt.pop %v1698
      %v1703 = vrsqrt.pop %v1699
      %v1704 = vmul.f32 %v1672, %v1700
      %v1705 = vmul.f32 %v1673, %v1701
      %v1706 = vmul.f32 %v1674, %v1702
      %v1707 = vmul.f32 %v1675, %v1703
      %v1708 = vlaneseq
      %v1709 = vshrl.u32 %v1708, 7
      %v1710 = vsub.s32 3, %v1709
      %v1711 = vrot.slane %v1319, %v1710
      %v1712 = vmul.f32 %v1704, %v1711
      %v1713 = vmul.f32 %v1705, %v1711
      %v1714 = vmul.f32 %v1706, %v1711
      %v1715 = vmul.f32 %v1707, %v1711
      %v1716 = vlaneseq
      %v1717 = vshrl.u32 %v1716, 7
      %v1718 = vsub.s32 4, %v1717
      %v1719 = vrot.slane %v1319, %v1718
      %v1720 = vadd.f32 %v1712, %v1719
      %v1721 = vadd.f32 %v1713, %v1719
      %v1722 = vadd.f32 %v1714, %v1719
      %v1723 = vadd.f32 %v1715, %v1719
    $region50: #{tpu_custom_call.1} parent=1 // loop_footer
      %s154 = sadd.s32 1, %s150
    $region51: #{tpu_custom_call.1} parent=1 // loop_footer_branch
      %149 = sbr.rel target = $region47
    $region52: #{tpu_custom_call.1} parent=1 // loop_exit
      _
    %vm1724 = vcmask 261120
    %1725 = vst.msk [vmem:[#allocation5] sm:$0xff] %vm1724, %v155
    %1726 = vst.msk [vmem:[#allocation5 + $0x8] sm:$0xff] %vm1724, %v156
    %1727 = vst.msk [vmem:[#allocation5 + $0x10] sm:$0xff] %vm1724, %v157
    %1728 = vst.msk [vmem:[#allocation5 + $0x18] sm:$0xff] %vm1724, %v158
    // Predicated region
    $region53: #{tpu_custom_call.1} parent=1 // pred_check
      _
    $region54: #{tpu_custom_call.1} parent=1 // pred_check_branch
      %1730 = sbr.rel (0) target = $region56
    $region55: #{tpu_custom_call.1} parent=1 // pred_region
      %s1732 = ssub.s32 512, 512
      %1733 = vsyncadd [#allocation4], %s1732
      %s1734 = sshll.u32 [#allocation5], 4
      %s1735 = int_to_ptr.vmem [resolvable:$true] %s1734
      %1740 = dma.vmem_to_hbm [thread:$0]  %s1735, 512, %s10, [#allocation4], 128, 128, 8
    $region56: #{tpu_custom_call.1} parent=1 // pred_fallthru
      _
    // Predicated region
    $region57: #{tpu_custom_call.1} parent=1 // pred_check
      _
    $region58: #{tpu_custom_call.1} parent=1 // pred_check_branch
      %1742 = sbr.rel (0) target = $region60
    $region59: #{tpu_custom_call.1} parent=1 // pred_region
      %1743 = dma.done [#allocation4], 512
    $region60: #{tpu_custom_call.1} parent=1 // pred_fallthru
      _
    %1744 = vsyncpa [#allocation3], 1
    %1745 = vsyncpa [#allocation4], 1

</llo_original>
